<compile_context>
chip_gen: v6e
topology: v6e:2x2x1
jax: 0.10.0
libtpu: 0.0.40
codegen_flags: <defaults>
</compile_context>

<pallas_src>
import functools

import jax
import jax.numpy as jnp
from jax import lax
from jax.experimental import pallas as pl
from jax.experimental.pallas import tpu as pltpu


# --------------------------------------------------------------------------
# Fused kernel: expand (MXU) -> depthwise (VPU) -> project (MXU) [+ residual]
# --------------------------------------------------------------------------
def _fused_inverted_residual_kernel(
        x_ref, w1_ref, b1_ref, wdw_ref, b2_ref, w3_ref, b3_ref,   # inputs
        o_ref,                                                     # output
        hp_ref,                                                    # VMEM scratch
        *, stride, th, h, w, wout, hidden, cout, use_res):
    f32 = jnp.float32
    s = pl.program_id(1)
    th_in = stride * th            # input rows consumed by this strip (bulk)
    row0_out = s * th              # first output row of this strip
    row0_in = s * th_in            # first (bulk) input row of this strip

    w1 = w1_ref[...].astype(f32)
    b1 = b1_ref[...].astype(f32)

    def expand_rows(x2d):
        y = jnp.dot(x2d, w1, preferred_element_type=f32) + b1
        return jnp.clip(y, 0.0, 6.0)

    # ---- zero the padded hidden scratch (provides all conv zero-padding) ----
    hp_ref[...] = jnp.zeros_like(hp_ref)

    # ---- stage 1: 1x1 expand + BN + ReLU6 into the padded VMEM scratch ------
    # bulk: scratch rows [1, th_in+1) <- input rows [row0_in, row0_in+th_in)
    x_bulk = x_ref[0, pl.ds(row0_in, th_in), :, :].astype(f32)      # (th_in, w, cin)
    cin = x_bulk.shape[-1]
    h_bulk = expand_rows(x_bulk.reshape(th_in * w, cin))            # (th_in*w, hidden)
    hp_ref[1:th_in + 1, 1:w + 1, :] = h_bulk.reshape(th_in, w, hidden)

    # top halo row (scratch row 0 <- input row row0_in-1); stays zero at s==0
    @pl.when(row0_in >= 1)
    def _():
        xr = x_ref[0, row0_in - 1, :, :].astype(f32)                # (w, cin)
        hp_ref[0, 1:w + 1, :] = expand_rows(xr)

    if stride == 1:
        # bottom halo row; stays zero at the last strip (bottom image padding)
        @pl.when(row0_in + th_in < h)
        def _():
            xr = x_ref[0, row0_in + th_in, :, :].astype(f32)
            hp_ref[th_in + 1, 1:w + 1, :] = expand_rows(xr)
    # for stride==2 the last scratch row is never read, so no bottom halo.

    # ---- stage 2: 3x3 depthwise + BN + ReLU6 (VPU, all reads stay in VMEM) --
    wdw = wdw_ref[...].astype(f32)                                  # (9, hidden)
    acc = jnp.zeros((th, wout, hidden), f32)
    for dy in range(3):
        for dx in range(3):
            if stride == 1:
                slab = hp_ref[dy:dy + th, dx:dx + wout, :]
            else:  # stride == 2: strided taps -> only the needed outputs
                slab = hp_ref[pl.ds(dy, th, stride=2),
                              pl.ds(dx, wout, stride=2), :]
            acc = acc + slab * wdw[3 * dy + dx, :].reshape(1, 1, hidden)
    dw = jnp.clip(acc + b2_ref[...].reshape(1, 1, hidden), 0.0, 6.0)

    # ---- stage 3: 1x1 project + BN (+ fused residual) ------------------------
    z = jnp.dot(dw.reshape(th * wout, hidden), w3_ref[...].astype(f32),
                preferred_element_type=f32)
    z = z + b3_ref[...].astype(f32)
    if use_res:
        xres = x_ref[0, pl.ds(row0_out, th), :, :].astype(f32)      # (th, w, cin)
        z = z + xres.reshape(th * wout, cout)
    o_ref[0] = z.reshape(th, wout, cout).astype(o_ref.dtype)


# --------------------------------------------------------------------------
# Wrapper
# --------------------------------------------------------------------------
def _pick_tile_rows(hout, max_rows):
    best = 1
    for cand in range(1, min(hout, max_rows) + 1):
        if hout % cand == 0:
            best = cand
    return best


def inverted_residual_fused(x_nhwc, params, *, stride, inp, oup,
                            max_tile_rows=8):
    n, h, w, cin = x_nhwc.shape
    assert cin == inp
    assert stride in (1, 2)
    if stride == 2:
        assert h % 2 == 0 and w % 2 == 0, "stride-2 path assumes even H, W"
    hidden = params["w1"].shape[1]
    hout, wout = h // stride, w // stride
    use_res = (stride == 1) and (inp == oup)

    th = _pick_tile_rows(hout, max_tile_rows)      # output rows per strip
    s_tiles = hout // th
    rpad = stride * th + 2                         # padded hidden rows / strip

    # Fold BN scale into conv weights at trace time (inference BN); keep bias.
    w1f = (params["w1"] * params["s1"][None, :]).astype(jnp.float32)
    b1 = params["b1"].reshape(1, hidden).astype(jnp.float32)
    wdwf = (params["wdw"] * params["s2"][None, None, :]
            ).reshape(9, hidden).astype(jnp.float32)
    b2 = params["b2"].reshape(1, hidden).astype(jnp.float32)
    w3f = (params["w3"] * params["s3"][None, :]).astype(jnp.float32)
    b3 = params["b3"].reshape(1, oup).astype(jnp.float32)

    kernel = functools.partial(
        _fused_inverted_residual_kernel,
        stride=stride, th=th, h=h, w=w, wout=wout,
        hidden=hidden, cout=oup, use_res=use_res)

    return pl.pallas_call(
        kernel,
        out_shape=jax.ShapeDtypeStruct((n, hout, wout, oup), x_nhwc.dtype),
        grid=(n, s_tiles),
        in_specs=[
            # full image per batch element; revisited across row-strips
            pl.BlockSpec((1, h, w, cin), lambda i, j: (i, 0, 0, 0)),
            pl.BlockSpec((cin, hidden), lambda i, j: (0, 0)),
            pl.BlockSpec((1, hidden), lambda i, j: (0, 0)),
            pl.BlockSpec((9, hidden), lambda i, j: (0, 0)),
            pl.BlockSpec((1, hidden), lambda i, j: (0, 0)),
            pl.BlockSpec((hidden, oup), lambda i, j: (0, 0)),
            pl.BlockSpec((1, oup), lambda i, j: (0, 0)),
        ],
        out_specs=pl.BlockSpec((1, th, wout, oup), lambda i, j: (i, j, 0, 0)),
        scratch_shapes=[pltpu.VMEM((rpad, w + 2, hidden), jnp.float32)],
        compiler_params=pltpu.CompilerParams(
            dimension_semantics=("parallel", "parallel")),
    )(x_nhwc, w1f, b1, wdwf, b2, w3f, b3)


# --------------------------------------------------------------------------
# Module: parameter init + forward (PyTorch NCHW interface)
# --------------------------------------------------------------------------
def _fold_bn(gamma, beta, mean, var, eps=1e-5):
    scale = gamma / jnp.sqrt(var + eps)
    bias = beta - mean * scale
    return scale.astype(jnp.float32), bias.astype(jnp.float32)


def init_inverted_residual_params(key, inp, oup, expand_ratio):
    hidden = inp * expand_ratio
    ks = jax.random.split(key, 6)

    def bn_params(k, c):
        k1, k2, k3, k4 = jax.random.split(k, 4)
        gamma = 1.0 + 0.1 * jax.random.normal(k1, (c,), jnp.float32)
        beta = 0.1 * jax.random.normal(k2, (c,), jnp.float32)
        mean = 0.1 * jax.random.normal(k3, (c,), jnp.float32)
        var = 1.0 + 0.1 * jax.random.uniform(k4, (c,), jnp.float32)
        return _fold_bn(gamma, beta, mean, var)

    w1 = 0.1 * jax.random.normal(ks[0], (inp, hidden), jnp.float32)     # expand
    s1, b1 = bn_params(ks[1], hidden)
    wdw = 0.1 * jax.random.normal(ks[2], (3, 3, hidden), jnp.float32)   # depthwise
    s2, b2 = bn_params(ks[3], hidden)
    w3 = 0.1 * jax.random.normal(ks[4], (hidden, oup), jnp.float32)     # project
    s3, b3 = bn_params(ks[5], oup)
    return dict(w1=w1, s1=s1, b1=b1, wdw=wdw, s2=s2, b2=b2, w3=w3, s3=s3, b3=b3)


def inverted_residual_forward(x_nchw, params, *, stride, inp, oup):
    x = jnp.transpose(x_nchw, (0, 2, 3, 1)).astype(jnp.float32)   # NCHW -> NHWC
    y = inverted_residual_fused(x, params, stride=stride, inp=inp, oup=oup)
    return jnp.transpose(y, (0, 3, 1, 2))                          # -> NCHW


# --------------------------------------------------------------------------
# Pure-JAX reference (for correctness check)
# --------------------------------------------------------------------------
def reference_forward(x_nchw, params, *, stride, inp, oup):
    x = jnp.transpose(x_nchw, (0, 2, 3, 1)).astype(jnp.float32)
    hidden = params["w1"].shape[1]
    dn = ("NHWC", "HWIO", "NHWC")

    y = lax.conv_general_dilated(x, params["w1"].reshape(1, 1, inp, hidden),
                                 (1, 1), "VALID", dimension_numbers=dn)
    y = jnp.clip(y * params["s1"] + params["b1"], 0.0, 6.0)

    y = lax.conv_general_dilated(y, params["wdw"].reshape(3, 3, 1, hidden),
                                 (stride, stride), ((1, 1), (1, 1)),
                                 dimension_numbers=dn,
                                 feature_group_count=hidden)
    y = jnp.clip(y * params["s2"] + params["b2"], 0.0, 6.0)

    y = lax.conv_general_dilated(y, params["w3"].reshape(1, 1, hidden, oup),
                                 (1, 1), "VALID", dimension_numbers=dn)
    y = y * params["s3"] + params["b3"]

    if stride == 1 and inp == oup:
        y = y + x
    return jnp.transpose(y, (0, 3, 1, 2))


# --------------------------------------------------------------------------
if __name__ == "__main__":
    key = jax.random.PRNGKey(0)
    k1, k2, k3, k4 = jax.random.split(key, 4)
    N, H, W = 2, 16, 16

    # Case 1: stride=1, inp==oup  -> residual branch exercised
    inp, oup, stride, expand = 8, 8, 1, 4
    x = jax.random.normal(k1, (N, inp, H, W), jnp.float32)
    params = init_inverted_residual_params(k2, inp, oup, expand)
    out = jax.block_until_ready(
        inverted_residual_forward(x, params, stride=stride, inp=inp, oup=oup))
    ref = jax.block_until_ready(
        reference_forward(x, params, stride=stride, inp=inp, oup=oup))
    assert out.shape == (N, oup, H, W), out.shape
    assert jnp.allclose(out, ref, atol=1e-3, rtol=1e-3), \
        float(jnp.max(jnp.abs(out - ref)))

    # Case 2: stride=2 downsampling path (no residual), in-kernel stride
    inp2, oup2, stride2, expand2 = 8, 16, 2, 4
    x2 = jax.random.normal(k3, (N, inp2, H, W), jnp.float32)
    params2 = init_inverted_residual_params(k4, inp2, oup2, expand2)
    out2 = jax.block_until_ready(
        inverted_residual_forward(x2, params2, stride=stride2, inp=inp2, oup=oup2))
    ref2 = jax.block_until_ready(
        reference_forward(x2, params2, stride=stride2, inp=inp2, oup=oup2))
    assert out2.shape == (N, oup2, H // 2, W // 2), out2.shape
    assert jnp.allclose(out2, ref2, atol=1e-3, rtol=1e-3), \
        float(jnp.max(jnp.abs(out2 - ref2)))

    print("KERNEL_OK")
</pallas_src>

<mosaic_0001>
module attributes {stable_mosaic.version = 11 : i64} {
  func.func @_fused_inverted_residual_kernel(%arg0: i32, %arg1: i32, %arg2: memref<1x16x16x8xf32, #tpu.memory_space<vmem>>, %arg3: memref<8x32xf32, #tpu.memory_space<vmem>>, %arg4: memref<1x32xf32, #tpu.memory_space<vmem>>, %arg5: memref<9x32xf32, #tpu.memory_space<vmem>>, %arg6: memref<1x32xf32, #tpu.memory_space<vmem>>, %arg7: memref<32x8xf32, #tpu.memory_space<vmem>>, %arg8: memref<1x8xf32, #tpu.memory_space<vmem>>, %arg9: memref<1x8x16x8xf32, #tpu.memory_space<vmem>>, %arg10: memref<10x18x32xf32, #tpu.memory_space<vmem>>) attributes {dimension_semantics = [#tpu.dimension_semantics<parallel>, #tpu.dimension_semantics<parallel>], iteration_bounds = array<i64: 2, 2>, scalar_prefetch = 0 : i64, scratch_operands = 1 : i64, tpu.core_type = #tpu.core_type<tc>, window_params = [{transform_indices = @transform_0, window_bounds = array<i64: 1, 16, 16, 8>}, {pipeline_mode = #tpu.pipeline_mode<synchronous>, transform_indices = @transform_1, window_bounds = array<i64: 8, 32>}, {pipeline_mode = #tpu.pipeline_mode<synchronous>, transform_indices = @transform_2, window_bounds = array<i64: 1, 32>}, {pipeline_mode = #tpu.pipeline_mode<synchronous>, transform_indices = @transform_3, window_bounds = array<i64: 9, 32>}, {pipeline_mode = #tpu.pipeline_mode<synchronous>, transform_indices = @transform_4, window_bounds = array<i64: 1, 32>}, {pipeline_mode = #tpu.pipeline_mode<synchronous>, transform_indices = @transform_5, window_bounds = array<i64: 32, 8>}, {pipeline_mode = #tpu.pipeline_mode<synchronous>, transform_indices = @transform_6, window_bounds = array<i64: 1, 8>}, {transform_indices = @transform_7, window_bounds = array<i64: 1, 8, 16, 8>}]} {
    %c8_i32 = arith.constant 8 : i32
    %0 = arith.muli %arg1, %c8_i32 : i32
    %c8_i32_0 = arith.constant 8 : i32
    %1 = arith.muli %arg1, %c8_i32_0 : i32
    %c0 = arith.constant 0 : index
    %c0_1 = arith.constant 0 : index
    %2 = vector.load %arg3[%c0, %c0_1] : memref<8x32xf32, #tpu.memory_space<vmem>>, vector<8x32xf32>
    %c0_2 = arith.constant 0 : index
    %c0_3 = arith.constant 0 : index
    %3 = vector.load %arg4[%c0_2, %c0_3] : memref<1x32xf32, #tpu.memory_space<vmem>>, vector<1x32xf32>
    %cst = arith.constant 0.000000e+00 : f32
    %4 = vector.broadcast %cst : f32 to vector<10x18x32xf32>
    %c0_4 = arith.constant 0 : index
    %c0_5 = arith.constant 0 : index
    %c0_6 = arith.constant 0 : index
    %5 = vector.load %arg10[%c0_4, %c0_5, %c0_6] : memref<10x18x32xf32, #tpu.memory_space<vmem>>, vector<10x18x32xf32>
    tpu.vector_store %arg10[%c0_4, %c0_5, %c0_6], %4 {strides = array<i32>} : memref<10x18x32xf32, #tpu.memory_space<vmem>>, vector<10x18x32xf32>,
    %c0_7 = arith.constant 0 : index
    %6 = arith.index_cast %1 : i32 to index
    %c0_8 = arith.constant 0 : index
    %c0_9 = arith.constant 0 : index
    %7 = vector.load %arg2[%c0_7, %6, %c0_8, %c0_9] : memref<1x16x16x8xf32, #tpu.memory_space<vmem>>, vector<1x8x16x8xf32>
    %8 = vector.shape_cast %7 : vector<1x8x16x8xf32> to vector<8x16x8xf32>
    %9 = vector.shape_cast %8 : vector<8x16x8xf32> to vector<128x8xf32>
    %cst_10 = arith.constant dense<0.000000e+00> : vector<128x32xf32>
    %10 = tpu.matmul %9, %2, %cst_10 {dimension_numbers = #tpu.dot_dimension_numbers<[1], [0], [0], [1], [0, 0, 1, 1], [], []>} : vector<128x8xf32>, vector<8x32xf32>, vector<128x32xf32> -> vector<128x32xf32>
    %11 = vector.broadcast %3 : vector<1x32xf32> to vector<128x32xf32>
    %12 = arith.addf %10, %11 : vector<128x32xf32>
    %cst_11 = arith.constant 0.000000e+00 : f32
    %cst_12 = arith.constant 6.000000e+00 : f32
    %13 = vector.broadcast %cst_11 : f32 to vector<128x32xf32>
    %14 = arith.maximumf %13, %12 : vector<128x32xf32>
    %15 = vector.broadcast %cst_12 : f32 to vector<128x32xf32>
    %16 = arith.minimumf %15, %14 : vector<128x32xf32>
    %17 = vector.shape_cast %16 : vector<128x32xf32> to vector<8x16x32xf32>
    %c1 = arith.constant 1 : index
    %c1_13 = arith.constant 1 : index
    %c0_14 = arith.constant 0 : index
    %18 = vector.load %arg10[%c1, %c1_13, %c0_14] : memref<10x18x32xf32, #tpu.memory_space<vmem>>, vector<8x16x32xf32>
    tpu.vector_store %arg10[%c1, %c1_13, %c0_14], %17 {strides = array<i32>} : memref<10x18x32xf32, #tpu.memory_space<vmem>>, vector<8x16x32xf32>,
    %c1_i32 = arith.constant 1 : i32
    %19 = arith.cmpi sge, %1, %c1_i32 : i32
    %20 = arith.extui %19 : i1 to i32
    %c0_i32 = arith.constant 0 : i32
    %21 = arith.cmpi ne, %20, %c0_i32 : i32
    scf.if %21 {
      %c1_i32_62 = arith.constant 1 : i32
      %114 = arith.subi %1, %c1_i32_62 : i32
      %c0_63 = arith.constant 0 : index
      %115 = arith.index_cast %114 : i32 to index
      %c0_64 = arith.constant 0 : index
      %c0_65 = arith.constant 0 : index
      %116 = vector.load %arg2[%c0_63, %115, %c0_64, %c0_65] : memref<1x16x16x8xf32, #tpu.memory_space<vmem>>, vector<1x1x16x8xf32>
      %117 = vector.shape_cast %116 : vector<1x1x16x8xf32> to vector<16x8xf32>
      %cst_66 = arith.constant dense<0.000000e+00> : vector<16x32xf32>
      %118 = tpu.matmul %117, %2, %cst_66 {dimension_numbers = #tpu.dot_dimension_numbers<[1], [0], [0], [1], [0, 0, 1, 1], [], []>} : vector<16x8xf32>, vector<8x32xf32>, vector<16x32xf32> -> vector<16x32xf32>
      %119 = vector.broadcast %3 : vector<1x32xf32> to vector<16x32xf32>
      %120 = arith.addf %118, %119 : vector<16x32xf32>
      %cst_67 = arith.constant 0.000000e+00 : f32
      %cst_68 = arith.constant 6.000000e+00 : f32
      %121 = vector.broadcast %cst_67 : f32 to vector<16x32xf32>
      %122 = arith.maximumf %121, %120 : vector<16x32xf32>
      %123 = vector.broadcast %cst_68 : f32 to vector<16x32xf32>
      %124 = arith.minimumf %123, %122 : vector<16x32xf32>
      %c0_69 = arith.constant 0 : index
      %c1_70 = arith.constant 1 : index
      %c0_71 = arith.constant 0 : index
      %125 = vector.load %arg10[%c0_69, %c1_70, %c0_71] : memref<10x18x32xf32, #tpu.memory_space<vmem>>, vector<1x16x32xf32>
      %126 = vector.shape_cast %125 : vector<1x16x32xf32> to vector<16x32xf32>
      %127 = vector.shape_cast %124 : vector<16x32xf32> to vector<1x16x32xf32>
      tpu.vector_store %arg10[%c0_69, %c1_70, %c0_71], %127 {strides = array<i32>} : memref<10x18x32xf32, #tpu.memory_space<vmem>>, vector<1x16x32xf32>,
    } else {
    }
    %c8_i32_15 = arith.constant 8 : i32
    %22 = arith.addi %1, %c8_i32_15 : i32
    %c16_i32 = arith.constant 16 : i32
    %23 = arith.cmpi slt, %22, %c16_i32 : i32
    %24 = arith.extui %23 : i1 to i32
    %c0_i32_16 = arith.constant 0 : i32
    %25 = arith.cmpi ne, %24, %c0_i32_16 : i32
    scf.if %25 {
      %c8_i32_62 = arith.constant 8 : i32
      %114 = arith.addi %1, %c8_i32_62 : i32
      %c0_63 = arith.constant 0 : index
      %115 = arith.index_cast %114 : i32 to index
      %c0_64 = arith.constant 0 : index
      %c0_65 = arith.constant 0 : index
      %116 = vector.load %arg2[%c0_63, %115, %c0_64, %c0_65] : memref<1x16x16x8xf32, #tpu.memory_space<vmem>>, vector<1x1x16x8xf32>
      %117 = vector.shape_cast %116 : vector<1x1x16x8xf32> to vector<16x8xf32>
      %cst_66 = arith.constant dense<0.000000e+00> : vector<16x32xf32>
      %118 = tpu.matmul %117, %2, %cst_66 {dimension_numbers = #tpu.dot_dimension_numbers<[1], [0], [0], [1], [0, 0, 1, 1], [], []>} : vector<16x8xf32>, vector<8x32xf32>, vector<16x32xf32> -> vector<16x32xf32>
      %119 = vector.broadcast %3 : vector<1x32xf32> to vector<16x32xf32>
      %120 = arith.addf %118, %119 : vector<16x32xf32>
      %cst_67 = arith.constant 0.000000e+00 : f32
      %cst_68 = arith.constant 6.000000e+00 : f32
      %121 = vector.broadcast %cst_67 : f32 to vector<16x32xf32>
      %122 = arith.maximumf %121, %120 : vector<16x32xf32>
      %123 = vector.broadcast %cst_68 : f32 to vector<16x32xf32>
      %124 = arith.minimumf %123, %122 : vector<16x32xf32>
      %c9 = arith.constant 9 : index
      %c1_69 = arith.constant 1 : index
      %c0_70 = arith.constant 0 : index
      %125 = vector.load %arg10[%c9, %c1_69, %c0_70] : memref<10x18x32xf32, #tpu.memory_space<vmem>>, vector<1x16x32xf32>
      %126 = vector.shape_cast %125 : vector<1x16x32xf32> to vector<16x32xf32>
      %127 = vector.shape_cast %124 : vector<16x32xf32> to vector<1x16x32xf32>
      tpu.vector_store %arg10[%c9, %c1_69, %c0_70], %127 {strides = array<i32>} : memref<10x18x32xf32, #tpu.memory_space<vmem>>, vector<1x16x32xf32>,
    } else {
    }
    %c0_17 = arith.constant 0 : index
    %c0_18 = arith.constant 0 : index
    %26 = vector.load %arg5[%c0_17, %c0_18] : memref<9x32xf32, #tpu.memory_space<vmem>>, vector<9x32xf32>
    %cst_19 = arith.constant 0.000000e+00 : f32
    %27 = vector.broadcast %cst_19 : f32 to vector<8x16x32xf32>
    %c0_20 = arith.constant 0 : index
    %c0_21 = arith.constant 0 : index
    %c0_22 = arith.constant 0 : index
    %28 = vector.load %arg10[%c0_20, %c0_21, %c0_22] : memref<10x18x32xf32, #tpu.memory_space<vmem>>, vector<8x16x32xf32>
    %29 = vector.extract_strided_slice %26 {offsets = [0, 0], sizes = [1, 32], strides = [1, 1]} : vector<9x32xf32> to vector<1x32xf32>
    %30 = vector.shape_cast %29 : vector<1x32xf32> to vector<32xf32>
    %31 = vector.shape_cast %30 : vector<32xf32> to vector<1x1x32xf32>
    %32 = vector.broadcast %31 : vector<1x1x32xf32> to vector<8x16x32xf32>
    %33 = arith.mulf %28, %32 : vector<8x16x32xf32>
    %34 = arith.addf %27, %33 : vector<8x16x32xf32>
    %c0_23 = arith.constant 0 : index
    %c1_24 = arith.constant 1 : index
    %c0_25 = arith.constant 0 : index
    %35 = vector.load %arg10[%c0_23, %c1_24, %c0_25] : memref<10x18x32xf32, #tpu.memory_space<vmem>>, vector<8x16x32xf32>
    %36 = vector.extract_strided_slice %26 {offsets = [1, 0], sizes = [1, 32], strides = [1, 1]} : vector<9x32xf32> to vector<1x32xf32>
    %37 = vector.shape_cast %36 : vector<1x32xf32> to vector<32xf32>
    %38 = vector.shape_cast %37 : vector<32xf32> to vector<1x1x32xf32>
    %39 = vector.broadcast %38 : vector<1x1x32xf32> to vector<8x16x32xf32>
    %40 = arith.mulf %35, %39 : vector<8x16x32xf32>
    %41 = arith.addf %34, %40 : vector<8x16x32xf32>
    %c0_26 = arith.constant 0 : index
    %c2 = arith.constant 2 : index
    %c0_27 = arith.constant 0 : index
    %42 = vector.load %arg10[%c0_26, %c2, %c0_27] : memref<10x18x32xf32, #tpu.memory_space<vmem>>, vector<8x16x32xf32>
    %43 = vector.extract_strided_slice %26 {offsets = [2, 0], sizes = [1, 32], strides = [1, 1]} : vector<9x32xf32> to vector<1x32xf32>
    %44 = vector.shape_cast %43 : vector<1x32xf32> to vector<32xf32>
    %45 = vector.shape_cast %44 : vector<32xf32> to vector<1x1x32xf32>
    %46 = vector.broadcast %45 : vector<1x1x32xf32> to vector<8x16x32xf32>
    %47 = arith.mulf %42, %46 : vector<8x16x32xf32>
    %48 = arith.addf %41, %47 : vector<8x16x32xf32>
    %c1_28 = arith.constant 1 : index
    %c0_29 = arith.constant 0 : index
    %c0_30 = arith.constant 0 : index
    %49 = vector.load %arg10[%c1_28, %c0_29, %c0_30] : memref<10x18x32xf32, #tpu.memory_space<vmem>>, vector<8x16x32xf32>
    %50 = vector.extract_strided_slice %26 {offsets = [3, 0], sizes = [1, 32], strides = [1, 1]} : vector<9x32xf32> to vector<1x32xf32>
    %51 = vector.shape_cast %50 : vector<1x32xf32> to vector<32xf32>
    %52 = vector.shape_cast %51 : vector<32xf32> to vector<1x1x32xf32>
    %53 = vector.broadcast %52 : vector<1x1x32xf32> to vector<8x16x32xf32>
    %54 = arith.mulf %49, %53 : vector<8x16x32xf32>
    %55 = arith.addf %48, %54 : vector<8x16x32xf32>
    %c1_31 = arith.constant 1 : index
    %c1_32 = arith.constant 1 : index
    %c0_33 = arith.constant 0 : index
    %56 = vector.load %arg10[%c1_31, %c1_32, %c0_33] : memref<10x18x32xf32, #tpu.memory_space<vmem>>, vector<8x16x32xf32>
    %57 = vector.extract_strided_slice %26 {offsets = [4, 0], sizes = [1, 32], strides = [1, 1]} : vector<9x32xf32> to vector<1x32xf32>
    %58 = vector.shape_cast %57 : vector<1x32xf32> to vector<32xf32>
    %59 = vector.shape_cast %58 : vector<32xf32> to vector<1x1x32xf32>
    %60 = vector.broadcast %59 : vector<1x1x32xf32> to vector<8x16x32xf32>
    %61 = arith.mulf %56, %60 : vector<8x16x32xf32>
    %62 = arith.addf %55, %61 : vector<8x16x32xf32>
    %c1_34 = arith.constant 1 : index
    %c2_35 = arith.constant 2 : index
    %c0_36 = arith.constant 0 : index
    %63 = vector.load %arg10[%c1_34, %c2_35, %c0_36] : memref<10x18x32xf32, #tpu.memory_space<vmem>>, vector<8x16x32xf32>
    %64 = vector.extract_strided_slice %26 {offsets = [5, 0], sizes = [1, 32], strides = [1, 1]} : vector<9x32xf32> to vector<1x32xf32>
    %65 = vector.shape_cast %64 : vector<1x32xf32> to vector<32xf32>
    %66 = vector.shape_cast %65 : vector<32xf32> to vector<1x1x32xf32>
    %67 = vector.broadcast %66 : vector<1x1x32xf32> to vector<8x16x32xf32>
    %68 = arith.mulf %63, %67 : vector<8x16x32xf32>
    %69 = arith.addf %62, %68 : vector<8x16x32xf32>
    %c2_37 = arith.constant 2 : index
    %c0_38 = arith.constant 0 : index
    %c0_39 = arith.constant 0 : index
    %70 = vector.load %arg10[%c2_37, %c0_38, %c0_39] : memref<10x18x32xf32, #tpu.memory_space<vmem>>, vector<8x16x32xf32>
    %71 = vector.extract_strided_slice %26 {offsets = [6, 0], sizes = [1, 32], strides = [1, 1]} : vector<9x32xf32> to vector<1x32xf32>
    %72 = vector.shape_cast %71 : vector<1x32xf32> to vector<32xf32>
    %73 = vector.shape_cast %72 : vector<32xf32> to vector<1x1x32xf32>
    %74 = vector.broadcast %73 : vector<1x1x32xf32> to vector<8x16x32xf32>
    %75 = arith.mulf %70, %74 : vector<8x16x32xf32>
    %76 = arith.addf %69, %75 : vector<8x16x32xf32>
    %c2_40 = arith.constant 2 : index
    %c1_41 = arith.constant 1 : index
    %c0_42 = arith.constant 0 : index
    %77 = vector.load %arg10[%c2_40, %c1_41, %c0_42] : memref<10x18x32xf32, #tpu.memory_space<vmem>>, vector<8x16x32xf32>
    %78 = vector.extract_strided_slice %26 {offsets = [7, 0], sizes = [1, 32], strides = [1, 1]} : vector<9x32xf32> to vector<1x32xf32>
    %79 = vector.shape_cast %78 : vector<1x32xf32> to vector<32xf32>
    %80 = vector.shape_cast %79 : vector<32xf32> to vector<1x1x32xf32>
    %81 = vector.broadcast %80 : vector<1x1x32xf32> to vector<8x16x32xf32>
    %82 = arith.mulf %77, %81 : vector<8x16x32xf32>
    %83 = arith.addf %76, %82 : vector<8x16x32xf32>
    %c2_43 = arith.constant 2 : index
    %c2_44 = arith.constant 2 : index
    %c0_45 = arith.constant 0 : index
    %84 = vector.load %arg10[%c2_43, %c2_44, %c0_45] : memref<10x18x32xf32, #tpu.memory_space<vmem>>, vector<8x16x32xf32>
    %85 = vector.extract_strided_slice %26 {offsets = [8, 0], sizes = [1, 32], strides = [1, 1]} : vector<9x32xf32> to vector<1x32xf32>
    %86 = vector.shape_cast %85 : vector<1x32xf32> to vector<32xf32>
    %87 = vector.shape_cast %86 : vector<32xf32> to vector<1x1x32xf32>
    %88 = vector.broadcast %87 : vector<1x1x32xf32> to vector<8x16x32xf32>
    %89 = arith.mulf %84, %88 : vector<8x16x32xf32>
    %90 = arith.addf %83, %89 : vector<8x16x32xf32>
    %c0_46 = arith.constant 0 : index
    %c0_47 = arith.constant 0 : index
    %91 = vector.load %arg6[%c0_46, %c0_47] : memref<1x32xf32, #tpu.memory_space<vmem>>, vector<1x32xf32>
    %92 = vector.shape_cast %91 : vector<1x32xf32> to vector<1x1x32xf32>
    %93 = vector.broadcast %92 : vector<1x1x32xf32> to vector<8x16x32xf32>
    %94 = arith.addf %90, %93 : vector<8x16x32xf32>
    %cst_48 = arith.constant 0.000000e+00 : f32
    %cst_49 = arith.constant 6.000000e+00 : f32
    %95 = vector.broadcast %cst_48 : f32 to vector<8x16x32xf32>
    %96 = arith.maximumf %95, %94 : vector<8x16x32xf32>
    %97 = vector.broadcast %cst_49 : f32 to vector<8x16x32xf32>
    %98 = arith.minimumf %97, %96 : vector<8x16x32xf32>
    %99 = vector.shape_cast %98 : vector<8x16x32xf32> to vector<128x32xf32>
    %c0_50 = arith.constant 0 : index
    %c0_51 = arith.constant 0 : index
    %100 = vector.load %arg7[%c0_50, %c0_51] : memref<32x8xf32, #tpu.memory_space<vmem>>, vector<32x8xf32>
    %cst_52 = arith.constant dense<0.000000e+00> : vector<128x8xf32>
    %101 = tpu.matmul %99, %100, %cst_52 {dimension_numbers = #tpu.dot_dimension_numbers<[1], [0], [0], [1], [0, 0, 1, 1], [], []>} : vector<128x32xf32>, vector<32x8xf32>, vector<128x8xf32> -> vector<128x8xf32>
    %c0_53 = arith.constant 0 : index
    %c0_54 = arith.constant 0 : index
    %102 = vector.load %arg8[%c0_53, %c0_54] : memref<1x8xf32, #tpu.memory_space<vmem>>, vector<1x8xf32>
    %103 = vector.broadcast %102 : vector<1x8xf32> to vector<128x8xf32>
    %104 = arith.addf %101, %103 : vector<128x8xf32>
    %c0_55 = arith.constant 0 : index
    %105 = arith.index_cast %0 : i32 to index
    %c0_56 = arith.constant 0 : index
    %c0_57 = arith.constant 0 : index
    %106 = vector.load %arg2[%c0_55, %105, %c0_56, %c0_57] : memref<1x16x16x8xf32, #tpu.memory_space<vmem>>, vector<1x8x16x8xf32>
    %107 = vector.shape_cast %106 : vector<1x8x16x8xf32> to vector<8x16x8xf32>
    %108 = vector.shape_cast %107 : vector<8x16x8xf32> to vector<128x8xf32>
    %109 = arith.addf %104, %108 : vector<128x8xf32>
    %110 = vector.shape_cast %109 : vector<128x8xf32> to vector<8x16x8xf32>
    %c0_58 = arith.constant 0 : index
    %c0_59 = arith.constant 0 : index
    %c0_60 = arith.constant 0 : index
    %c0_61 = arith.constant 0 : index
    %111 = vector.load %arg9[%c0_58, %c0_59, %c0_60, %c0_61] : memref<1x8x16x8xf32, #tpu.memory_space<vmem>>, vector<1x8x16x8xf32>
    %112 = vector.shape_cast %111 : vector<1x8x16x8xf32> to vector<8x16x8xf32>
    %113 = vector.shape_cast %110 : vector<8x16x8xf32> to vector<1x8x16x8xf32>
    tpu.vector_store %arg9[%c0_58, %c0_59, %c0_60, %c0_61], %113 {strides = array<i32>} : memref<1x8x16x8xf32, #tpu.memory_space<vmem>>, vector<1x8x16x8xf32>,
    return
  }
  func.func @transform_0(%arg0: i32, %arg1: i32) -> (i32, i32, i32, i32) {
    %c0_i32 = arith.constant 0 : i32
    %c0_i32_0 = arith.constant 0 : i32
    %c0_i32_1 = arith.constant 0 : i32
    %c0_i32_2 = arith.constant 0 : i32
    return %arg0, %c0_i32, %c0_i32_0, %c0_i32_1 : i32, i32, i32, i32
  }
  func.func @transform_1(%arg0: i32, %arg1: i32) -> (i32, i32) {
    %c0_i32 = arith.constant 0 : i32
    %c0_i32_0 = arith.constant 0 : i32
    %c0_i32_1 = arith.constant 0 : i32
    return %c0_i32, %c0_i32_0 : i32, i32
  }
  func.func @transform_2(%arg0: i32, %arg1: i32) -> (i32, i32) {
    %c0_i32 = arith.constant 0 : i32
    %c0_i32_0 = arith.constant 0 : i32
    %c0_i32_1 = arith.constant 0 : i32
    return %c0_i32, %c0_i32_0 : i32, i32
  }
  func.func @transform_3(%arg0: i32, %arg1: i32) -> (i32, i32) {
    %c0_i32 = arith.constant 0 : i32
    %c0_i32_0 = arith.constant 0 : i32
    %c0_i32_1 = arith.constant 0 : i32
    return %c0_i32, %c0_i32_0 : i32, i32
  }
  func.func @transform_4(%arg0: i32, %arg1: i32) -> (i32, i32) {
    %c0_i32 = arith.constant 0 : i32
    %c0_i32_0 = arith.constant 0 : i32
    %c0_i32_1 = arith.constant 0 : i32
    return %c0_i32, %c0_i32_0 : i32, i32
  }
  func.func @transform_5(%arg0: i32, %arg1: i32) -> (i32, i32) {
    %c0_i32 = arith.constant 0 : i32
    %c0_i32_0 = arith.constant 0 : i32
    %c0_i32_1 = arith.constant 0 : i32
    return %c0_i32, %c0_i32_0 : i32, i32
  }
  func.func @transform_6(%arg0: i32, %arg1: i32) -> (i32, i32) {
    %c0_i32 = arith.constant 0 : i32
    %c0_i32_0 = arith.constant 0 : i32
    %c0_i32_1 = arith.constant 0 : i32
    return %c0_i32, %c0_i32_0 : i32, i32
  }
  func.func @transform_7(%arg0: i32, %arg1: i32) -> (i32, i32, i32, i32) {
    %c0_i32 = arith.constant 0 : i32
    %c0_i32_0 = arith.constant 0 : i32
    %c0_i32_1 = arith.constant 0 : i32
    return %arg0, %arg1, %c0_i32, %c0_i32_0 : i32, i32, i32, i32
  }
}

</mosaic_0001>

<llo_original>
// kernel: tpu_custom_call.1
$region0: #{tpu_custom_call.1}
  #allocation0 [shape = 'u32[]', space=smem, size = 0x4, offset = 0x4, fixed_abs, tag = 'smem constant byte address 0x4 - core index']
  #allocation1 [shape = 'u32[144,128]{1,0:T(1,128)}', space=vmem, size = 0x12000, scoped, tag = 'internal scratch']
  #allocation2 [shape = 'f32[10,18,32]{2,1,0:T(8,128)}', space=vmem, size = 0x1e000, scoped, tag = 'scratch operand']
  %s0 = inlined_call_operand.vmem [shape: f32[2,16,16,8], index: 0, kind: input, shape index: {}]
  %s1 = inlined_call_operand.vmem [shape: f32[8,32], index: 1, kind: input, shape index: {}]
  %s2 = inlined_call_operand.vmem [shape: f32[1,32], index: 2, kind: input, shape index: {}]
  %s3 = inlined_call_operand.vmem [shape: f32[9,32], index: 3, kind: input, shape index: {}]
  %s4 = inlined_call_operand.vmem [shape: f32[1,32], index: 4, kind: input, shape index: {}]
  %s5 = inlined_call_operand.vmem [shape: f32[32,8], index: 5, kind: input, shape index: {}]
  %s6 = inlined_call_operand.vmem [shape: f32[1,8], index: 6, kind: input, shape index: {}]
  %s7 = inlined_call_operand.vmem [shape: f32[2,16,16,8], index: 7, kind: output, shape index: {}]
  %s8 = sld [smem:[#allocation0]]
  $region69: #{tpu_custom_call.1} parent=0
    _
  %s10 = ssub.s32 1, %s8
  %s11 = scalar_select 0, %s10, %s8
  loop: start=0, step=1, limit=6
  $region2: #{tpu_custom_call.1} parent=0 // loop_pre_header
    _
  $region3: #{tpu_custom_call.1} parent=0 // loop_header
    %s13 = sphi 0, %s17
    %p14 = scmp.ge.s32.totalorder %s13, 6
    %s20 = sphi 0, %s32
    %s21 = sphi 0, %s28
    %s22 = sphi 0, %s20
    %s23 = sphi 0, %s21
    %s24 = sphi 0, %s22
    %s25 = sphi 0, %s23
    %s35 = sphi 0, %s37
    %s38 = sphi 0, %s35
    %s39 = sphi 0, %s38
    %s55 = sphi 0, %s39
    %s59 = sphi 0, %s59
    %s61 = sphi 0, %s59
    %s62 = sphi 0, %s61
    %s76 = sphi 0, %s62
    %s80 = sphi 0, %s80
    %s82 = sphi 0, %s80
    %s83 = sphi 0, %s82
    %s97 = sphi 0, %s83
    %s101 = sphi 0, %s101
    %s103 = sphi 0, %s101
    %s104 = sphi 0, %s103
    %s118 = sphi 0, %s104
    %s122 = sphi 0, %s122
    %s124 = sphi 0, %s122
    %s125 = sphi 0, %s124
    %s139 = sphi 0, %s125
    %s143 = sphi 0, %s143
    %s145 = sphi 0, %s143
    %s146 = sphi 0, %s145
    %s160 = sphi 0, %s146
    %s164 = sphi 0, %s164
    %s166 = sphi 0, %s164
    %s167 = sphi 0, %s166
    %s181 = sphi 0, %s167
    %s189 = sphi 0, %s191
    %s192 = sphi 0, %s189
    %s193 = sphi 0, %s192
    %s209 = sphi 0, %s193
  $region4: #{tpu_custom_call.1} parent=0 // loop_header_branch
    %16 = sbr.rel (%p14) target = $region8
  $region5: #{tpu_custom_call.1} parent=0 // loop_body
    %s18 = ssub.s32 %s13, 1
    %s19 = ssub.s32 %s13, 2
    %s26 = sadd.s32 1, %s21
    %p27 = scmp.ge.s32.totalorder %s26, 2
    %s28 = scalar_select %p27, 0, %s26
    %s29 = sadd.s32 1, %s20
    %s30 = scalar_select %p27, %s29, %s20
    %p31 = scmp.ge.s32.totalorder %s30, 2
    %s32 = scalar_select %p31, 0, %s30
    %s33 = ssub.s32 %s20, %s32
    %p34 = scmp.eq.s32.totalorder %s33, 0
    %s36 = sadd.s32 %s35, 1
    %s37 = scalar_select %p34, %s35, %s36
    %p40 = pneg %p34
    %p41 = scmp.eq.s32.totalorder %s13, 3
    %p42 = por %p40, %p41
    %p43 = scmp.ne.s32.totalorder %s35, %s38
    %p44 = scmp.eq.s32.totalorder %s13, 0
    %p45 = por %p43, %p44
    %p46 = scmp.ne.s32.totalorder %s35, %s38
    %p47 = scmp.eq.s32.totalorder %s18, 3
    %p48 = por %p46, %p47
    %p49 = scmp.ne.s32.totalorder %s38, %s39
    %p50 = scmp.eq.s32.totalorder %s18, 0
    %p51 = por %p49, %p50
    %p52 = scmp.ne.s32.totalorder %s38, %s39
    %p53 = scmp.eq.s32.totalorder %s19, 3
    %p54 = por %p52, %p53
    %p56 = scmp.ne.s32.totalorder %s39, %s55
    %p57 = scmp.eq.s32.totalorder %s19, 0
    %p58 = por %p56, %p57
    %s60 = sadd.s32 %s59, 1
    %p63 = scmp.eq.s32.totalorder %s13, 3
    %p64 = scmp.ne.s32.totalorder %s59, %s61
    %p65 = scmp.eq.s32.totalorder %s13, 0
    %p66 = por %p64, %p65
    %p67 = scmp.ne.s32.totalorder %s59, %s61
    %p68 = scmp.eq.s32.totalorder %s18, 3
    %p69 = por %p67, %p68
    %p70 = scmp.ne.s32.totalorder %s61, %s62
    %p71 = scmp.eq.s32.totalorder %s18, 0
    %p72 = por %p70, %p71
    %p73 = scmp.ne.s32.totalorder %s61, %s62
    %p74 = scmp.eq.s32.totalorder %s19, 3
    %p75 = por %p73, %p74
    %p77 = scmp.ne.s32.totalorder %s62, %s76
    %p78 = scmp.eq.s32.totalorder %s19, 0
    %p79 = por %p77, %p78
    %s81 = sadd.s32 %s80, 1
    %p84 = scmp.eq.s32.totalorder %s13, 3
    %p85 = scmp.ne.s32.totalorder %s80, %s82
    %p86 = scmp.eq.s32.totalorder %s13, 0
    %p87 = por %p85, %p86
    %p88 = scmp.ne.s32.totalorder %s80, %s82
    %p89 = scmp.eq.s32.totalorder %s18, 3
    %p90 = por %p88, %p89
    %p91 = scmp.ne.s32.totalorder %s82, %s83
    %p92 = scmp.eq.s32.totalorder %s18, 0
    %p93 = por %p91, %p92
    %p94 = scmp.ne.s32.totalorder %s82, %s83
    %p95 = scmp.eq.s32.totalorder %s19, 3
    %p96 = por %p94, %p95
    %p98 = scmp.ne.s32.totalorder %s83, %s97
    %p99 = scmp.eq.s32.totalorder %s19, 0
    %p100 = por %p98, %p99
    %s102 = sadd.s32 %s101, 1
    %p105 = scmp.eq.s32.totalorder %s13, 3
    %p106 = scmp.ne.s32.totalorder %s101, %s103
    %p107 = scmp.eq.s32.totalorder %s13, 0
    %p108 = por %p106, %p107
    %p109 = scmp.ne.s32.totalorder %s101, %s103
    %p110 = scmp.eq.s32.totalorder %s18, 3
    %p111 = por %p109, %p110
    %p112 = scmp.ne.s32.totalorder %s103, %s104
    %p113 = scmp.eq.s32.totalorder %s18, 0
    %p114 = por %p112, %p113
    %p115 = scmp.ne.s32.totalorder %s103, %s104
    %p116 = scmp.eq.s32.totalorder %s19, 3
    %p117 = por %p115, %p116
    %p119 = scmp.ne.s32.totalorder %s104, %s118
    %p120 = scmp.eq.s32.totalorder %s19, 0
    %p121 = por %p119, %p120
    %s123 = sadd.s32 %s122, 1
    %p126 = scmp.eq.s32.totalorder %s13, 3
    %p127 = scmp.ne.s32.totalorder %s122, %s124
    %p128 = scmp.eq.s32.totalorder %s13, 0
    %p129 = por %p127, %p128
    %p130 = scmp.ne.s32.totalorder %s122, %s124
    %p131 = scmp.eq.s32.totalorder %s18, 3
    %p132 = por %p130, %p131
    %p133 = scmp.ne.s32.totalorder %s124, %s125
    %p134 = scmp.eq.s32.totalorder %s18, 0
    %p135 = por %p133, %p134
    %p136 = scmp.ne.s32.totalorder %s124, %s125
    %p137 = scmp.eq.s32.totalorder %s19, 3
    %p138 = por %p136, %p137
    %p140 = scmp.ne.s32.totalorder %s125, %s139
    %p141 = scmp.eq.s32.totalorder %s19, 0
    %p142 = por %p140, %p141
    %s144 = sadd.s32 %s143, 1
    %p147 = scmp.eq.s32.totalorder %s13, 3
    %p148 = scmp.ne.s32.totalorder %s143, %s145
    %p149 = scmp.eq.s32.totalorder %s13, 0
    %p150 = por %p148, %p149
    %p151 = scmp.ne.s32.totalorder %s143, %s145
    %p152 = scmp.eq.s32.totalorder %s18, 3
    %p153 = por %p151, %p152
    %p154 = scmp.ne.s32.totalorder %s145, %s146
    %p155 = scmp.eq.s32.totalorder %s18, 0
    %p156 = por %p154, %p155
    %p157 = scmp.ne.s32.totalorder %s145, %s146
    %p158 = scmp.eq.s32.totalorder %s19, 3
    %p159 = por %p157, %p158
    %p161 = scmp.ne.s32.totalorder %s146, %s160
    %p162 = scmp.eq.s32.totalorder %s19, 0
    %p163 = por %p161, %p162
    %s165 = sadd.s32 %s164, 1
    %p168 = scmp.eq.s32.totalorder %s13, 3
    %p169 = scmp.ne.s32.totalorder %s164, %s166
    %p170 = scmp.eq.s32.totalorder %s13, 0
    %p171 = por %p169, %p170
    %p172 = scmp.ne.s32.totalorder %s164, %s166
    %p173 = scmp.eq.s32.totalorder %s18, 3
    %p174 = por %p172, %p173
    %p175 = scmp.ne.s32.totalorder %s166, %s167
    %p176 = scmp.eq.s32.totalorder %s18, 0
    %p177 = por %p175, %p176
    %p178 = scmp.ne.s32.totalorder %s166, %s167
    %p179 = scmp.eq.s32.totalorder %s19, 3
    %p180 = por %p178, %p179
    %p182 = scmp.ne.s32.totalorder %s167, %s181
    %p183 = scmp.eq.s32.totalorder %s19, 0
    %p184 = por %p182, %p183
    %s185 = ssub.s32 %s20, %s32
    %s186 = ssub.s32 %s21, %s28
    %s187 = sor.u32 %s185, %s186
    %p188 = scmp.eq.s32.totalorder %s187, 0
    %s190 = sadd.s32 %s189, 1
    %s191 = scalar_select %p188, %s189, %s190
    %p194 = pneg %p188
    %p195 = scmp.eq.s32.totalorder %s13, 3
    %p196 = por %p194, %p195
    %p197 = scmp.ne.s32.totalorder %s189, %s192
    %p198 = scmp.eq.s32.totalorder %s13, 0
    %p199 = por %p197, %p198
    %p200 = scmp.ne.s32.totalorder %s189, %s192
    %p201 = scmp.eq.s32.totalorder %s18, 3
    %p202 = por %p200, %p201
    %p203 = scmp.ne.s32.totalorder %s192, %s193
    %p204 = scmp.eq.s32.totalorder %s18, 0
    %p205 = por %p203, %p204
    %p206 = scmp.ne.s32.totalorder %s192, %s193
    %p207 = scmp.eq.s32.totalorder %s19, 3
    %p208 = por %p206, %p207
    %p210 = scmp.ne.s32.totalorder %s193, %s209
    %p211 = scmp.eq.s32.totalorder %s19, 0
    %p212 = por %p210, %p211
    %p213 = scmp.le.s32.totalorder 1, %s13
    %p214 = scmp.lt.s32.totalorder %s13, 5
    %p215 = pnand %p213, %p214
    %p216 = pneg %p215
    // Predicated region
    $region9: #{tpu_custom_call.1} parent=5 // pred_check
      _
    $region10: #{tpu_custom_call.1} parent=5 // pred_check_branch
      %218 = sbr.rel (%p215) target = $region12
    $region11: #{tpu_custom_call.1} parent=5 // pred_region
      %s219 = ssub.s32 %s13, 1
      // Predicated region
      $region13: #{tpu_custom_call.1} parent=11 // pred_check
        %p220 = pneg %p72
      $region14: #{tpu_custom_call.1} parent=11 // pred_check_branch
        %222 = sbr.rel (%p220) target = $region16
      $region15: #{tpu_custom_call.1} parent=11 // pred_region
        _
      $region16: #{tpu_custom_call.1} parent=11 // pred_fallthru
        _
      // Predicated region
      $region17: #{tpu_custom_call.1} parent=11 // pred_check
        %p223 = pneg %p93
      $region18: #{tpu_custom_call.1} parent=11 // pred_check_branch
        %225 = sbr.rel (%p223) target = $region20
      $region19: #{tpu_custom_call.1} parent=11 // pred_region
        _
      $region20: #{tpu_custom_call.1} parent=11 // pred_fallthru
        _
      // Predicated region
      $region21: #{tpu_custom_call.1} parent=11 // pred_check
        %p226 = pneg %p114
      $region22: #{tpu_custom_call.1} parent=11 // pred_check_branch
        %228 = sbr.rel (%p226) target = $region24
      $region23: #{tpu_custom_call.1} parent=11 // pred_region
        _
      $region24: #{tpu_custom_call.1} parent=11 // pred_fallthru
        _
      // Predicated region
      $region25: #{tpu_custom_call.1} parent=11 // pred_check
        %p229 = pneg %p135
      $region26: #{tpu_custom_call.1} parent=11 // pred_check_branch
        %231 = sbr.rel (%p229) target = $region28
      $region27: #{tpu_custom_call.1} parent=11 // pred_region
        _
      $region28: #{tpu_custom_call.1} parent=11 // pred_fallthru
        _
      // Predicated region
      $region29: #{tpu_custom_call.1} parent=11 // pred_check
        %p232 = pneg %p156
      $region30: #{tpu_custom_call.1} parent=11 // pred_check_branch
        %234 = sbr.rel (%p232) target = $region32
      $region31: #{tpu_custom_call.1} parent=11 // pred_region
        _
      $region32: #{tpu_custom_call.1} parent=11 // pred_fallthru
        _
      // Predicated region
      $region33: #{tpu_custom_call.1} parent=11 // pred_check
        %p235 = pneg %p177
      $region34: #{tpu_custom_call.1} parent=11 // pred_check_branch
        %237 = sbr.rel (%p235) target = $region36
      $region35: #{tpu_custom_call.1} parent=11 // pred_region
        _
      $region36: #{tpu_custom_call.1} parent=11 // pred_fallthru
        _
    $region12: #{tpu_custom_call.1} parent=5 // pred_fallthru
      _
    %p238 = scmp.lt.s32.totalorder %s13, 4
    // Predicated region
    $region37: #{tpu_custom_call.1} parent=5 // pred_check
      %p239 = pneg %p238
    $region38: #{tpu_custom_call.1} parent=5 // pred_check_branch
      %241 = sbr.rel (%p239) target = $region40
    $region39: #{tpu_custom_call.1} parent=5 // pred_region
      // Predicated region
      $region41: #{tpu_custom_call.1} parent=39 // pred_check
        %p242 = pneg %p45
      $region42: #{tpu_custom_call.1} parent=39 // pred_check_branch
        %244 = sbr.rel (%p242) target = $region44
      $region43: #{tpu_custom_call.1} parent=39 // pred_region
        %p245 = scmp.lt.s32.totalorder %s20, 1
        %s246 = scalar_select %p245, %s20, 1
        %s247 = smul.addr %s246, 32
        %s248 = smul.addr %s247, 8
        %s249 = scalar_lea.vmem %s0, %s248
      $region44: #{tpu_custom_call.1} parent=39 // pred_fallthru
        _
    $region40: #{tpu_custom_call.1} parent=5 // pred_fallthru
      _
    %p250 = scmp.le.s32.totalorder 1, %s13
    %p251 = scmp.lt.s32.totalorder %s13, 5
    %p252 = pnand %p250, %p251
    %p253 = pneg %p252
    // Predicated region
    $region45: #{tpu_custom_call.1} parent=5 // pred_check
      _
    $region46: #{tpu_custom_call.1} parent=5 // pred_check_branch
      %255 = sbr.rel (%p252) target = $region48
    $region47: #{tpu_custom_call.1} parent=5 // pred_region
      %s256 = ssub.s32 %s13, 1
      %p257 = scmp.lt.s32.totalorder %s22, 1
      %s258 = scalar_select %p257, %s22, 1
      %s259 = smul.addr %s258, 32
      %s260 = smul.addr %s259, 8
      %s261 = scalar_lea.vmem %s0, %s260
      %p262 = pneg %p51
      %p263 = pneg %p48
      %p264 = pneg %p72
      %p265 = pneg %p69
      %p266 = pneg %p93
      %p267 = pneg %p90
      %p268 = pneg %p114
      %p269 = pneg %p111
      %p270 = pneg %p135
      %p271 = pneg %p132
      %p272 = pneg %p156
      %p273 = pneg %p153
      %p274 = pneg %p177
      %p275 = pneg %p174
      %p276 = pneg %p205
      %p277 = pneg %p202
      %s278 = smul.u32 8, %s23
      %p279 = scmp.lt.s32.totalorder %s22, 1
      %s280 = scalar_select %p279, %s22, 1
      %p281 = scmp.lt.s32.totalorder %s278, 15
      %s282 = scalar_select %p281, %s278, 15
      %s283 = smul.addr %s282, 2
      %s284 = smul.addr %s280, 32
      %s285 = sadd.s32 %s283, %s284
      %s286 = smul.addr %s285, 8
      %s287 = scalar_lea.vmem %s7, %s286
      %p288 = scmp.lt.s32.totalorder %s22, 1
      %s289 = scalar_select %p288, %s22, 1
      %s290 = smul.addr %s289, 32
      %s291 = smul.addr %s290, 8
      %s292 = scalar_lea.vmem %s0, %s291
      %s293 = smul.u32 8, %s23
      %p294 = scmp.lt.s32.totalorder %s22, 1
      %s295 = scalar_select %p294, %s22, 1
      %p296 = scmp.lt.s32.totalorder %s293, 15
      %s297 = scalar_select %p296, %s293, 15
      %s298 = smul.addr %s297, 2
      %s299 = smul.addr %s295, 32
      %s300 = sadd.s32 %s298, %s299
      %s301 = smul.addr %s300, 8
      %s302 = scalar_lea.vmem %s7, %s301
      %s303 = smul.u32 8, %s23
      %s304 = smul.u32 %s23, 8
      %v305 = vld [vmem:[%s1] sm:$0xff]
      %v306 = vld [vmem:[%s2] sm:$0x1]
      %vm307 = vcmask 261120
      %308 = vst.msk [vmem:[#allocation2] sm:$0xff] %vm307, 0.0
      %309 = vst.msk [vmem:[#allocation2 + $0x8] sm:$0xff] %vm307, 0.0
      %vm310 = vcmask 254976
      %311 = vst.msk [vmem:[#allocation2 + $0x10] sm:$0x3] %vm310, 0.0
      %312 = vst.msk [vmem:[#allocation2 + $0x18] sm:$0xff] %vm307, 0.0
      %313 = vst.msk [vmem:[#allocation2 + $0x20] sm:$0xff] %vm307, 0.0
      %314 = vst.msk [vmem:[#allocation2 + $0x28] sm:$0x3] %vm310, 0.0
      %315 = vst.msk [vmem:[#allocation2 + $0x30] sm:$0xff] %vm307, 0.0
      %316 = vst.msk [vmem:[#allocation2 + $0x38] sm:$0xff] %vm307, 0.0
      %317 = vst.msk [vmem:[#allocation2 + $0x40] sm:$0x3] %vm310, 0.0
      %318 = vst.msk [vmem:[#allocation2 + $0x48] sm:$0xff] %vm307, 0.0
      %319 = vst.msk [vmem:[#allocation2 + $0x50] sm:$0xff] %vm307, 0.0
      %320 = vst.msk [vmem:[#allocation2 + $0x58] sm:$0x3] %vm310, 0.0
      %321 = vst.msk [vmem:[#allocation2 + $0x60] sm:$0xff] %vm307, 0.0
      %322 = vst.msk [vmem:[#allocation2 + $0x68] sm:$0xff] %vm307, 0.0
      %323 = vst.msk [vmem:[#allocation2 + $0x70] sm:$0x3] %vm310, 0.0
      %324 = vst.msk [vmem:[#allocation2 + $0x78] sm:$0xff] %vm307, 0.0
      %325 = vst.msk [vmem:[#allocation2 + $0x80] sm:$0xff] %vm307, 0.0
      %326 = vst.msk [vmem:[#allocation2 + $0x88] sm:$0x3] %vm310, 0.0
      %327 = vst.msk [vmem:[#allocation2 + $0x90] sm:$0xff] %vm307, 0.0
      %328 = vst.msk [vmem:[#allocation2 + $0x98] sm:$0xff] %vm307, 0.0
      %329 = vst.msk [vmem:[#allocation2 + $0xa0] sm:$0x3] %vm310, 0.0
      %330 = vst.msk [vmem:[#allocation2 + $0xa8] sm:$0xff] %vm307, 0.0
      %331 = vst.msk [vmem:[#allocation2 + $0xb0] sm:$0xff] %vm307, 0.0
      %332 = vst.msk [vmem:[#allocation2 + $0xb8] sm:$0x3] %vm310, 0.0
      %333 = vst.msk [vmem:[#allocation2 + $0xc0] sm:$0xff] %vm307, 0.0
      %334 = vst.msk [vmem:[#allocation2 + $0xc8] sm:$0xff] %vm307, 0.0
      %335 = vst.msk [vmem:[#allocation2 + $0xd0] sm:$0x3] %vm310, 0.0
      %336 = vst.msk [vmem:[#allocation2 + $0xd8] sm:$0xff] %vm307, 0.0
      %337 = vst.msk [vmem:[#allocation2 + $0xe0] sm:$0xff] %vm307, 0.0
      %338 = vst.msk [vmem:[#allocation2 + $0xe8] sm:$0x3] %vm310, 0.0
      %s339 = smul.u32 %s304, 16
      %s340 = scalar_lea.vmem %s292, %s339
      %v341 = vld [vmem:[%s340] sm:$0xff]
      %v342 = vld [vmem:[%s340 + $0x8] sm:$0xff]
      %v343 = vld [vmem:[%s340 + $0x10] sm:$0xff]
      %v344 = vld [vmem:[%s340 + $0x18] sm:$0xff]
      %v345 = vld [vmem:[%s340 + $0x20] sm:$0xff]
      %v346 = vld [vmem:[%s340 + $0x28] sm:$0xff]
      %v347 = vld [vmem:[%s340 + $0x30] sm:$0xff]
      %v348 = vld [vmem:[%s340 + $0x38] sm:$0xff]
      %v349 = vld [vmem:[%s340 + $0x40] sm:$0xff]
      %v350 = vld [vmem:[%s340 + $0x48] sm:$0xff]
      %v351 = vld [vmem:[%s340 + $0x50] sm:$0xff]
      %v352 = vld [vmem:[%s340 + $0x58] sm:$0xff]
      %v353 = vld [vmem:[%s340 + $0x60] sm:$0xff]
      %v354 = vld [vmem:[%s340 + $0x68] sm:$0xff]
      %v355 = vld [vmem:[%s340 + $0x70] sm:$0xff]
      %v356 = vld [vmem:[%s340 + $0x78] sm:$0xff]
      %v358 = vlaneseq
      %v359 = vshrl.u32 %v358, 7
      %v360 = vsub.s32 0, %v359
      %v361 = vrot.slane %v306, %v360
      %vm363 = vcmask 64512
      %v365 = vsel %vm363, %v341, 0
      %v368 = vsel %vm363, %v342, 0
      %v371 = vsel %vm363, %v343, 0
      %v374 = vsel %vm363, %v344, 0
      %v377 = vsel %vm363, %v345, 0
      %v380 = vsel %vm363, %v346, 0
      %v383 = vsel %vm363, %v347, 0
      %v386 = vsel %vm363, %v348, 0
      %v389 = vsel %vm363, %v349, 0
      %v392 = vsel %vm363, %v350, 0
      %v395 = vsel %vm363, %v351, 0
      %v398 = vsel %vm363, %v352, 0
      %v401 = vsel %vm363, %v353, 0
      %v404 = vsel %vm363, %v354, 0
      %v407 = vsel %vm363, %v355, 0
      %v410 = vsel %vm363, %v356, 0
      %412 = vmatprep.subr.mxu0 0.0
      %413 = vmatpush1.msra.mxu0 0.0
      %414 = vmatprep.subr.mxu0 0.0
      %415 = vmatpush1.msra.mxu0 0.0
      %416 = vmatprep.subr.mxu0 0.0
      %417 = vmatpush1.msra.mxu0 0.0
      %418 = vmatprep.subr.mxu0 0.0
      %419 = vmatpush1.msra.mxu0 0.0
      %420 = vmatprep.subr.mxu0 0.0
      %421 = vmatpush1.msra.mxu0 0.0
      %422 = vmatprep.subr.mxu0 0.0
      %423 = vmatpush1.msra.mxu0 0.0
      %424 = vmatprep.subr.mxu0 0.0
      %425 = vmatpush1.msra.mxu0 0.0
      %426 = vmatprep.subr.mxu0 0.0
      %427 = vmatpush1.msra.mxu0 0.0
      %428 = vmatprep.subr.mxu0 0.0
      %429 = vmatpush1.msra.mxu0 0.0
      %430 = vmatprep.subr.mxu0 0.0
      %431 = vmatpush1.msra.mxu0 0.0
      %432 = vmatprep.subr.mxu0 0.0
      %433 = vmatpush1.msra.mxu0 0.0
      %434 = vmatprep.subr.mxu0 0.0
      %435 = vmatpush1.msra.mxu0 0.0
      %436 = vmatprep.subr.mxu0 0.0
      %437 = vmatpush1.msra.mxu0 0.0
      %438 = vmatprep.subr.mxu0 0.0
      %439 = vmatpush1.msra.mxu0 0.0
      %440 = vmatprep.subr.mxu0 0.0
      %441 = vmatpush1.msra.mxu0 0.0
      %442 = vmatprep.subr.mxu0 0.0
      %443 = vmatpush1.msra.mxu0 %v305
      %444 = vmatprep.subr.mxu0 0.0
      %445 = vmatpush2.msra.mxu0 0.0
      %446 = vmatprep.subr.mxu0 0.0
      %447 = vmatpush2.msra.mxu0 0.0
      %448 = vmatprep.subr.mxu0 0.0
      %449 = vmatpush2.msra.mxu0 0.0
      %450 = vmatprep.subr.mxu0 0.0
      %451 = vmatpush2.msra.mxu0 0.0
      %452 = vmatprep.subr.mxu0 0.0
      %453 = vmatpush2.msra.mxu0 0.0
      %454 = vmatprep.subr.mxu0 0.0
      %455 = vmatpush2.msra.mxu0 0.0
      %456 = vmatprep.subr.mxu0 0.0
      %457 = vmatpush2.msra.mxu0 0.0
      %458 = vmatprep.subr.mxu0 0.0
      %459 = vmatpush2.msra.mxu0 0.0
      %460 = vmatprep.subr.mxu0 0.0
      %461 = vmatpush2.msra.mxu0 0.0
      %462 = vmatprep.subr.mxu0 0.0
      %463 = vmatpush2.msra.mxu0 0.0
      %464 = vmatprep.subr.mxu0 0.0
      %465 = vmatpush2.msra.mxu0 0.0
      %466 = vmatprep.subr.mxu0 0.0
      %467 = vmatpush2.msra.mxu0 0.0
      %468 = vmatprep.subr.mxu0 0.0
      %469 = vmatpush2.msra.mxu0 0.0
      %470 = vmatprep.subr.mxu0 0.0
      %471 = vmatpush2.msra.mxu0 0.0
      %472 = vmatprep.subr.mxu0 0.0
      %473 = vmatpush2.msra.mxu0 0.0
      %474 = vmatprep.subr.mxu0 0.0
      %475 = vmatpush2.msra.mxu0 0.0
      %476 = vmatprep.mubr.f32.mxu0 0.0
      %477 = vmatmul.mubr.f32.gmra.mxu0 %v365
      %v478 = vpop.f32.mrf.mxu0
      %v479 = vadd.f32 %v361, %v478
      %v480 = vpop.f32.mrf.mxu0
      %481 = vmatprep.mubr.f32.mxu0 0.0
      %482 = vmatmul.mubr.f32.gmra.mxu0 %v368
      %v483 = vpop.f32.mrf.mxu0
      %v484 = vadd.f32 %v361, %v483
      %v485 = vpop.f32.mrf.mxu0
      %486 = vmatprep.mubr.f32.mxu0 0.0
      %487 = vmatmul.mubr.f32.gmra.mxu0 %v371
      %v488 = vpop.f32.mrf.mxu0
      %v489 = vadd.f32 %v361, %v488
      %v490 = vpop.f32.mrf.mxu0
      %491 = vmatprep.mubr.f32.mxu0 0.0
      %492 = vmatmul.mubr.f32.gmra.mxu0 %v374
      %v493 = vpop.f32.mrf.mxu0
      %v494 = vadd.f32 %v361, %v493
      %v495 = vpop.f32.mrf.mxu0
      %496 = vmatprep.mubr.f32.mxu0 0.0
      %497 = vmatmul.mubr.f32.gmra.mxu0 %v377
      %v498 = vpop.f32.mrf.mxu0
      %v499 = vadd.f32 %v361, %v498
      %v500 = vpop.f32.mrf.mxu0
      %501 = vmatprep.mubr.f32.mxu0 0.0
      %502 = vmatmul.mubr.f32.gmra.mxu0 %v380
      %v503 = vpop.f32.mrf.mxu0
      %v504 = vadd.f32 %v361, %v503
      %v505 = vpop.f32.mrf.mxu0
      %506 = vmatprep.mubr.f32.mxu0 0.0
      %507 = vmatmul.mubr.f32.gmra.mxu0 %v383
      %v508 = vpop.f32.mrf.mxu0
      %v509 = vadd.f32 %v361, %v508
      %v510 = vpop.f32.mrf.mxu0
      %511 = vmatprep.mubr.f32.mxu0 0.0
      %512 = vmatmul.mubr.f32.gmra.mxu0 %v386
      %v513 = vpop.f32.mrf.mxu0
      %v514 = vadd.f32 %v361, %v513
      %v515 = vpop.f32.mrf.mxu0
      %516 = vmatprep.mubr.f32.mxu0 0.0
      %517 = vmatmul.mubr.f32.gmra.mxu0 %v389
      %v518 = vpop.f32.mrf.mxu0
      %v519 = vadd.f32 %v361, %v518
      %v520 = vpop.f32.mrf.mxu0
      %521 = vmatprep.mubr.f32.mxu0 0.0
      %522 = vmatmul.mubr.f32.gmra.mxu0 %v392
      %v523 = vpop.f32.mrf.mxu0
      %v524 = vadd.f32 %v361, %v523
      %v525 = vpop.f32.mrf.mxu0
      %526 = vmatprep.mubr.f32.mxu0 0.0
      %527 = vmatmul.mubr.f32.gmra.mxu0 %v395
      %v528 = vpop.f32.mrf.mxu0
      %v529 = vadd.f32 %v361, %v528
      %v530 = vpop.f32.mrf.mxu0
      %531 = vmatprep.mubr.f32.mxu0 0.0
      %532 = vmatmul.mubr.f32.gmra.mxu0 %v398
      %v533 = vpop.f32.mrf.mxu0
      %v534 = vadd.f32 %v361, %v533
      %v535 = vpop.f32.mrf.mxu0
      %536 = vmatprep.mubr.f32.mxu0 0.0
      %537 = vmatmul.mubr.f32.gmra.mxu0 %v401
      %v538 = vpop.f32.mrf.mxu0
      %v539 = vadd.f32 %v361, %v538
      %v540 = vpop.f32.mrf.mxu0
      %541 = vmatprep.mubr.f32.mxu0 0.0
      %542 = vmatmul.mubr.f32.gmra.mxu0 %v404
      %v543 = vpop.f32.mrf.mxu0
      %v544 = vadd.f32 %v361, %v543
      %v545 = vpop.f32.mrf.mxu0
      %546 = vmatprep.mubr.f32.mxu0 0.0
      %547 = vmatmul.mubr.f32.gmra.mxu0 %v407
      %v548 = vpop.f32.mrf.mxu0
      %v549 = vadd.f32 %v361, %v548
      %v550 = vpop.f32.mrf.mxu0
      %551 = vmatprep.mubr.f32.mxu0 0.0
      %552 = vmatmul.mubr.f32.gmra.mxu0 %v410
      %v553 = vpop.f32.mrf.mxu0
      %v554 = vadd.f32 %v361, %v553
      %v555 = vpop.f32.mrf.mxu0
      %556 = vdwg.mxu0
      %v557 = vmax.f32 %v479, 0.0
      %v558 = vmax.f32 %v484, 0.0
      %v559 = vmax.f32 %v489, 0.0
      %v560 = vmax.f32 %v494, 0.0
      %v561 = vmax.f32 %v499, 0.0
      %v562 = vmax.f32 %v504, 0.0
      %v563 = vmax.f32 %v509, 0.0
      %v564 = vmax.f32 %v514, 0.0
      %v565 = vmax.f32 %v519, 0.0
      %v566 = vmax.f32 %v524, 0.0
      %v567 = vmax.f32 %v529, 0.0
      %v568 = vmax.f32 %v534, 0.0
      %v569 = vmax.f32 %v539, 0.0
      %v570 = vmax.f32 %v544, 0.0
      %v571 = vmax.f32 %v549, 0.0
      %v572 = vmax.f32 %v554, 0.0
      %v573 = vmin.f32 %v557, 6.0
      %v574 = vmin.f32 %v558, 6.0
      %v575 = vmin.f32 %v559, 6.0
      %v576 = vmin.f32 %v560, 6.0
      %v577 = vmin.f32 %v561, 6.0
      %v578 = vmin.f32 %v562, 6.0
      %v579 = vmin.f32 %v563, 6.0
      %v580 = vmin.f32 %v564, 6.0
      %v581 = vmin.f32 %v565, 6.0
      %v582 = vmin.f32 %v566, 6.0
      %v583 = vmin.f32 %v567, 6.0
      %v584 = vmin.f32 %v568, 6.0
      %v585 = vmin.f32 %v569, 6.0
      %v586 = vmin.f32 %v570, 6.0
      %v587 = vmin.f32 %v571, 6.0
      %v588 = vmin.f32 %v572, 6.0
      %s589 = scalar_lea.vmem [#allocation2], 24
      %590 = vst.msk [vmem:[%s589 + $0x1] sm:$0xff] %vm307, %v573
      %591 = vst.msk [vmem:[%s589 + $0x9] sm:$0xff] %vm307, %v574
      %592 = vst.msk [vmem:[%s589 + $0x19] sm:$0xff] %vm307, %v575
      %593 = vst.msk [vmem:[%s589 + $0x21] sm:$0xff] %vm307, %v576
      %594 = vst.msk [vmem:[%s589 + $0x31] sm:$0xff] %vm307, %v577
      %595 = vst.msk [vmem:[%s589 + $0x39] sm:$0xff] %vm307, %v578
      %596 = vst.msk [vmem:[%s589 + $0x49] sm:$0xff] %vm307, %v579
      %597 = vst.msk [vmem:[%s589 + $0x51] sm:$0xff] %vm307, %v580
      %598 = vst.msk [vmem:[%s589 + $0x61] sm:$0xff] %vm307, %v581
      %599 = vst.msk [vmem:[%s589 + $0x69] sm:$0xff] %vm307, %v582
      %600 = vst.msk [vmem:[%s589 + $0x79] sm:$0xff] %vm307, %v583
      %601 = vst.msk [vmem:[%s589 + $0x81] sm:$0xff] %vm307, %v584
      %602 = vst.msk [vmem:[%s589 + $0x91] sm:$0xff] %vm307, %v585
      %603 = vst.msk [vmem:[%s589 + $0x99] sm:$0xff] %vm307, %v586
      %604 = vst.msk [vmem:[%s589 + $0xa9] sm:$0xff] %vm307, %v587
      %605 = vst.msk [vmem:[%s589 + $0xb1] sm:$0xff] %vm307, %v588
      %p606 = scmp.ge.s32.totalorder %s304, 1
      // Predicated region
      $region49: #{tpu_custom_call.1} parent=47 // pred_check
        %p607 = pneg %p606
      $region50: #{tpu_custom_call.1} parent=47 // pred_check_branch
        %609 = sbr.rel (%p607) target = $region52
      $region51: #{tpu_custom_call.1} parent=47 // pred_region
        %s610 = ssub.s32 %s304, 1
        %s611 = smul.u32 %s610, 16
        %s612 = scalar_lea.vmem %s292, %s611
        %v613 = vld [vmem:[%s612] sm:$0xff]
        %v614 = vld [vmem:[%s612 + $0x8] sm:$0xff]
        %v616 = vsel %vm363, %v613, 0
        %v619 = vsel %vm363, %v614, 0
        %621 = vmatprep.subr.mxu0 0.0
        %622 = vmatpush1.msra.mxu0 0.0
        %623 = vmatprep.subr.mxu0 0.0
        %624 = vmatpush1.msra.mxu0 0.0
        %625 = vmatprep.subr.mxu0 0.0
        %626 = vmatpush1.msra.mxu0 0.0
        %627 = vmatprep.subr.mxu0 0.0
        %628 = vmatpush1.msra.mxu0 0.0
        %629 = vmatprep.subr.mxu0 0.0
        %630 = vmatpush1.msra.mxu0 0.0
        %631 = vmatprep.subr.mxu0 0.0
        %632 = vmatpush1.msra.mxu0 0.0
        %633 = vmatprep.subr.mxu0 0.0
        %634 = vmatpush1.msra.mxu0 0.0
        %635 = vmatprep.subr.mxu0 0.0
        %636 = vmatpush1.msra.mxu0 0.0
        %637 = vmatprep.subr.mxu0 0.0
        %638 = vmatpush1.msra.mxu0 0.0
        %639 = vmatprep.subr.mxu0 0.0
        %640 = vmatpush1.msra.mxu0 0.0
        %641 = vmatprep.subr.mxu0 0.0
        %642 = vmatpush1.msra.mxu0 0.0
        %643 = vmatprep.subr.mxu0 0.0
        %644 = vmatpush1.msra.mxu0 0.0
        %645 = vmatprep.subr.mxu0 0.0
        %646 = vmatpush1.msra.mxu0 0.0
        %647 = vmatprep.subr.mxu0 0.0
        %648 = vmatpush1.msra.mxu0 0.0
        %649 = vmatprep.subr.mxu0 0.0
        %650 = vmatpush1.msra.mxu0 0.0
        %651 = vmatprep.subr.mxu0 0.0
        %652 = vmatpush1.msra.mxu0 %v305
        %653 = vmatprep.subr.mxu0 0.0
        %654 = vmatpush2.msra.mxu0 0.0
        %655 = vmatprep.subr.mxu0 0.0
        %656 = vmatpush2.msra.mxu0 0.0
        %657 = vmatprep.subr.mxu0 0.0
        %658 = vmatpush2.msra.mxu0 0.0
        %659 = vmatprep.subr.mxu0 0.0
        %660 = vmatpush2.msra.mxu0 0.0
        %661 = vmatprep.subr.mxu0 0.0
        %662 = vmatpush2.msra.mxu0 0.0
        %663 = vmatprep.subr.mxu0 0.0
        %664 = vmatpush2.msra.mxu0 0.0
        %665 = vmatprep.subr.mxu0 0.0
        %666 = vmatpush2.msra.mxu0 0.0
        %667 = vmatprep.subr.mxu0 0.0
        %668 = vmatpush2.msra.mxu0 0.0
        %669 = vmatprep.subr.mxu0 0.0
        %670 = vmatpush2.msra.mxu0 0.0
        %671 = vmatprep.subr.mxu0 0.0
        %672 = vmatpush2.msra.mxu0 0.0
        %673 = vmatprep.subr.mxu0 0.0
        %674 = vmatpush2.msra.mxu0 0.0
        %675 = vmatprep.subr.mxu0 0.0
        %676 = vmatpush2.msra.mxu0 0.0
        %677 = vmatprep.subr.mxu0 0.0
        %678 = vmatpush2.msra.mxu0 0.0
        %679 = vmatprep.subr.mxu0 0.0
        %680 = vmatpush2.msra.mxu0 0.0
        %681 = vmatprep.subr.mxu0 0.0
        %682 = vmatpush2.msra.mxu0 0.0
        %683 = vmatprep.subr.mxu0 0.0
        %684 = vmatpush2.msra.mxu0 0.0
        %685 = vmatprep.mubr.f32.mxu0 0.0
        %686 = vmatmul.mubr.f32.gmra.mxu0 %v616
        %v687 = vpop.f32.mrf.mxu0
        %v688 = vadd.f32 %v361, %v687
        %v689 = vpop.f32.mrf.mxu0
        %690 = vmatprep.mubr.f32.mxu0 0.0
        %691 = vmatmul.mubr.f32.gmra.mxu0 %v619
        %v692 = vpop.f32.mrf.mxu0
        %v693 = vadd.f32 %v361, %v692
        %v694 = vpop.f32.mrf.mxu0
        %695 = vdwg.mxu0
        %v696 = vmax.f32 %v688, 0.0
        %v697 = vmax.f32 %v693, 0.0
        %v698 = vmin.f32 %v696, 6.0
        %v699 = vmin.f32 %v697, 6.0
        %700 = vst.msk [vmem:[#allocation2 + $0x1] sm:$0xff] %vm307, %v698
        %701 = vst.msk [vmem:[#allocation2 + $0x9] sm:$0xff] %vm307, %v699
      $region52: #{tpu_custom_call.1} parent=47 // pred_fallthru
        _
      %s702 = sadd.s32 %s304, 8
      %p703 = scmp.lt.s32.totalorder %s702, 16
      // Predicated region
      $region53: #{tpu_custom_call.1} parent=47 // pred_check
        %p704 = pneg %p703
      $region54: #{tpu_custom_call.1} parent=47 // pred_check_branch
        %706 = sbr.rel (%p704) target = $region56
      $region55: #{tpu_custom_call.1} parent=47 // pred_region
        %s707 = smul.u32 %s702, 16
        %s708 = scalar_lea.vmem %s292, %s707
        %v709 = vld [vmem:[%s708] sm:$0xff]
        %v710 = vld [vmem:[%s708 + $0x8] sm:$0xff]
        %v712 = vsel %vm363, %v709, 0
        %v715 = vsel %vm363, %v710, 0
        %717 = vmatprep.subr.mxu0 0.0
        %718 = vmatpush1.msra.mxu0 0.0
        %719 = vmatprep.subr.mxu0 0.0
        %720 = vmatpush1.msra.mxu0 0.0
        %721 = vmatprep.subr.mxu0 0.0
        %722 = vmatpush1.msra.mxu0 0.0
        %723 = vmatprep.subr.mxu0 0.0
        %724 = vmatpush1.msra.mxu0 0.0
        %725 = vmatprep.subr.mxu0 0.0
        %726 = vmatpush1.msra.mxu0 0.0
        %727 = vmatprep.subr.mxu0 0.0
        %728 = vmatpush1.msra.mxu0 0.0
        %729 = vmatprep.subr.mxu0 0.0
        %730 = vmatpush1.msra.mxu0 0.0
        %731 = vmatprep.subr.mxu0 0.0
        %732 = vmatpush1.msra.mxu0 0.0
        %733 = vmatprep.subr.mxu0 0.0
        %734 = vmatpush1.msra.mxu0 0.0
        %735 = vmatprep.subr.mxu0 0.0
        %736 = vmatpush1.msra.mxu0 0.0
        %737 = vmatprep.subr.mxu0 0.0
        %738 = vmatpush1.msra.mxu0 0.0
        %739 = vmatprep.subr.mxu0 0.0
        %740 = vmatpush1.msra.mxu0 0.0
        %741 = vmatprep.subr.mxu0 0.0
        %742 = vmatpush1.msra.mxu0 0.0
        %743 = vmatprep.subr.mxu0 0.0
        %744 = vmatpush1.msra.mxu0 0.0
        %745 = vmatprep.subr.mxu0 0.0
        %746 = vmatpush1.msra.mxu0 0.0
        %747 = vmatprep.subr.mxu0 0.0
        %748 = vmatpush1.msra.mxu0 %v305
        %749 = vmatprep.subr.mxu0 0.0
        %750 = vmatpush2.msra.mxu0 0.0
        %751 = vmatprep.subr.mxu0 0.0
        %752 = vmatpush2.msra.mxu0 0.0
        %753 = vmatprep.subr.mxu0 0.0
        %754 = vmatpush2.msra.mxu0 0.0
        %755 = vmatprep.subr.mxu0 0.0
        %756 = vmatpush2.msra.mxu0 0.0
        %757 = vmatprep.subr.mxu0 0.0
        %758 = vmatpush2.msra.mxu0 0.0
        %759 = vmatprep.subr.mxu0 0.0
        %760 = vmatpush2.msra.mxu0 0.0
        %761 = vmatprep.subr.mxu0 0.0
        %762 = vmatpush2.msra.mxu0 0.0
        %763 = vmatprep.subr.mxu0 0.0
        %764 = vmatpush2.msra.mxu0 0.0
        %765 = vmatprep.subr.mxu0 0.0
        %766 = vmatpush2.msra.mxu0 0.0
        %767 = vmatprep.subr.mxu0 0.0
        %768 = vmatpush2.msra.mxu0 0.0
        %769 = vmatprep.subr.mxu0 0.0
        %770 = vmatpush2.msra.mxu0 0.0
        %771 = vmatprep.subr.mxu0 0.0
        %772 = vmatpush2.msra.mxu0 0.0
        %773 = vmatprep.subr.mxu0 0.0
        %774 = vmatpush2.msra.mxu0 0.0
        %775 = vmatprep.subr.mxu0 0.0
        %776 = vmatpush2.msra.mxu0 0.0
        %777 = vmatprep.subr.mxu0 0.0
        %778 = vmatpush2.msra.mxu0 0.0
        %779 = vmatprep.subr.mxu0 0.0
        %780 = vmatpush2.msra.mxu0 0.0
        %781 = vmatprep.mubr.f32.mxu0 0.0
        %782 = vmatmul.mubr.f32.gmra.mxu0 %v712
        %v783 = vpop.f32.mrf.mxu0
        %v784 = vadd.f32 %v361, %v783
        %v785 = vpop.f32.mrf.mxu0
        %786 = vmatprep.mubr.f32.mxu0 0.0
        %787 = vmatmul.mubr.f32.gmra.mxu0 %v715
        %v788 = vpop.f32.mrf.mxu0
        %v789 = vadd.f32 %v361, %v788
        %v790 = vpop.f32.mrf.mxu0
        %791 = vdwg.mxu0
        %v792 = vmax.f32 %v784, 0.0
        %v793 = vmax.f32 %v789, 0.0
        %v794 = vmin.f32 %v792, 6.0
        %v795 = vmin.f32 %v793, 6.0
        %s796 = scalar_lea.vmem [#allocation2], 216
        %797 = vst.msk [vmem:[%s796 + $0x1] sm:$0xff] %vm307, %v794
        %798 = vst.msk [vmem:[%s796 + $0x9] sm:$0xff] %vm307, %v795
      $region56: #{tpu_custom_call.1} parent=47 // pred_fallthru
        _
      %v799 = vld [vmem:[%s3] sm:$0xff]
      %v800 = vld [vmem:[%s3 + $0x8] sm:$0x1]
      %v801 = vld [vmem:[#allocation2] sm:$0xff]
      %v802 = vld [vmem:[#allocation2 + $0x8] sm:$0xff]
      %v803 = vld [vmem:[#allocation2 + $0x18] sm:$0xff]
      %v804 = vld [vmem:[#allocation2 + $0x20] sm:$0xff]
      %v805 = vld [vmem:[#allocation2 + $0x30] sm:$0xff]
      %v806 = vld [vmem:[#allocation2 + $0x38] sm:$0xff]
      %v807 = vld [vmem:[#allocation2 + $0x48] sm:$0xff]
      %v808 = vld [vmem:[#allocation2 + $0x50] sm:$0xff]
      %v809 = vld [vmem:[#allocation2 + $0x60] sm:$0xff]
      %v810 = vld [vmem:[#allocation2 + $0x68] sm:$0xff]
      %v811 = vld [vmem:[#allocation2 + $0x78] sm:$0xff]
      %v812 = vld [vmem:[#allocation2 + $0x80] sm:$0xff]
      %v813 = vld [vmem:[#allocation2 + $0x90] sm:$0xff]
      %v814 = vld [vmem:[#allocation2 + $0x98] sm:$0xff]
      %v815 = vld [vmem:[#allocation2 + $0xa8] sm:$0xff]
      %v816 = vld [vmem:[#allocation2 + $0xb0] sm:$0xff]
      %v817 = vlaneseq
      %v818 = vshrl.u32 %v817, 7
      %v819 = vsub.s32 0, %v818
      %v820 = vrot.slane %v799, %v819
      %v821 = vmul.f32 %v801, %v820
      %v822 = vmul.f32 %v802, %v820
      %v823 = vmul.f32 %v803, %v820
      %v824 = vmul.f32 %v804, %v820
      %v825 = vmul.f32 %v805, %v820
      %v826 = vmul.f32 %v806, %v820
      %v827 = vmul.f32 %v807, %v820
      %v828 = vmul.f32 %v808, %v820
      %v829 = vmul.f32 %v809, %v820
      %v830 = vmul.f32 %v810, %v820
      %v831 = vmul.f32 %v811, %v820
      %v832 = vmul.f32 %v812, %v820
      %v833 = vmul.f32 %v813, %v820
      %v834 = vmul.f32 %v814, %v820
      %v835 = vmul.f32 %v815, %v820
      %v836 = vmul.f32 %v816, %v820
      %v837 = vadd.f32 %v821, 0.0
      %v838 = vadd.f32 %v822, 0.0
      %v839 = vadd.f32 %v823, 0.0
      %v840 = vadd.f32 %v824, 0.0
      %v841 = vadd.f32 %v825, 0.0
      %v842 = vadd.f32 %v826, 0.0
      %v843 = vadd.f32 %v827, 0.0
      %v844 = vadd.f32 %v828, 0.0
      %v845 = vadd.f32 %v829, 0.0
      %v846 = vadd.f32 %v830, 0.0
      %v847 = vadd.f32 %v831, 0.0
      %v848 = vadd.f32 %v832, 0.0
      %v849 = vadd.f32 %v833, 0.0
      %v850 = vadd.f32 %v834, 0.0
      %v851 = vadd.f32 %v835, 0.0
      %v852 = vadd.f32 %v836, 0.0
      %v853 = vld [vmem:[#allocation2 + $0x1] sm:$0xff]
      %v854 = vld [vmem:[#allocation2 + $0x9] sm:$0xff]
      %v855 = vld [vmem:[#allocation2 + $0x19] sm:$0xff]
      %v856 = vld [vmem:[#allocation2 + $0x21] sm:$0xff]
      %v857 = vld [vmem:[#allocation2 + $0x31] sm:$0xff]
      %v858 = vld [vmem:[#allocation2 + $0x39] sm:$0xff]
      %v859 = vld [vmem:[#allocation2 + $0x49] sm:$0xff]
      %v860 = vld [vmem:[#allocation2 + $0x51] sm:$0xff]
      %v861 = vld [vmem:[#allocation2 + $0x61] sm:$0xff]
      %v862 = vld [vmem:[#allocation2 + $0x69] sm:$0xff]
      %v863 = vld [vmem:[#allocation2 + $0x79] sm:$0xff]
      %v864 = vld [vmem:[#allocation2 + $0x81] sm:$0xff]
      %v865 = vld [vmem:[#allocation2 + $0x91] sm:$0xff]
      %v866 = vld [vmem:[#allocation2 + $0x99] sm:$0xff]
      %v867 = vld [vmem:[#allocation2 + $0xa9] sm:$0xff]
      %v868 = vld [vmem:[#allocation2 + $0xb1] sm:$0xff]
      %v869 = vlaneseq
      %v870 = vshrl.u32 %v869, 7
      %v871 = vsub.s32 1, %v870
      %v872 = vrot.slane %v799, %v871
      %v873 = vmul.f32 %v853, %v872
      %v874 = vmul.f32 %v854, %v872
      %v875 = vmul.f32 %v855, %v872
      %v876 = vmul.f32 %v856, %v872
      %v877 = vmul.f32 %v857, %v872
      %v878 = vmul.f32 %v858, %v872
      %v879 = vmul.f32 %v859, %v872
      %v880 = vmul.f32 %v860, %v872
      %v881 = vmul.f32 %v861, %v872
      %v882 = vmul.f32 %v862, %v872
      %v883 = vmul.f32 %v863, %v872
      %v884 = vmul.f32 %v864, %v872
      %v885 = vmul.f32 %v865, %v872
      %v886 = vmul.f32 %v866, %v872
      %v887 = vmul.f32 %v867, %v872
      %v888 = vmul.f32 %v868, %v872
      %v889 = vadd.f32 %v837, %v873
      %v890 = vadd.f32 %v838, %v874
      %v891 = vadd.f32 %v839, %v875
      %v892 = vadd.f32 %v840, %v876
      %v893 = vadd.f32 %v841, %v877
      %v894 = vadd.f32 %v842, %v878
      %v895 = vadd.f32 %v843, %v879
      %v896 = vadd.f32 %v844, %v880
      %v897 = vadd.f32 %v845, %v881
      %v898 = vadd.f32 %v846, %v882
      %v899 = vadd.f32 %v847, %v883
      %v900 = vadd.f32 %v848, %v884
      %v901 = vadd.f32 %v849, %v885
      %v902 = vadd.f32 %v850, %v886
      %v903 = vadd.f32 %v851, %v887
      %v904 = vadd.f32 %v852, %v888
      %v905 = vld [vmem:[#allocation2 + $0x2] sm:$0xff]
      %v906 = vld [vmem:[#allocation2 + $0xa] sm:$0xff]
      %v907 = vld [vmem:[#allocation2 + $0x1a] sm:$0xff]
      %v908 = vld [vmem:[#allocation2 + $0x22] sm:$0xff]
      %v909 = vld [vmem:[#allocation2 + $0x32] sm:$0xff]
      %v910 = vld [vmem:[#allocation2 + $0x3a] sm:$0xff]
      %v911 = vld [vmem:[#allocation2 + $0x4a] sm:$0xff]
      %v912 = vld [vmem:[#allocation2 + $0x52] sm:$0xff]
      %v913 = vld [vmem:[#allocation2 + $0x62] sm:$0xff]
      %v914 = vld [vmem:[#allocation2 + $0x6a] sm:$0xff]
      %v915 = vld [vmem:[#allocation2 + $0x7a] sm:$0xff]
      %v916 = vld [vmem:[#allocation2 + $0x82] sm:$0xff]
      %v917 = vld [vmem:[#allocation2 + $0x92] sm:$0xff]
      %v918 = vld [vmem:[#allocation2 + $0x9a] sm:$0xff]
      %v919 = vld [vmem:[#allocation2 + $0xaa] sm:$0xff]
      %v920 = vld [vmem:[#allocation2 + $0xb2] sm:$0xff]
      %v921 = vlaneseq
      %v922 = vshrl.u32 %v921, 7
      %v923 = vsub.s32 2, %v922
      %v924 = vrot.slane %v799, %v923
      %v925 = vmul.f32 %v905, %v924
      %v926 = vmul.f32 %v906, %v924
      %v927 = vmul.f32 %v907, %v924
      %v928 = vmul.f32 %v908, %v924
      %v929 = vmul.f32 %v909, %v924
      %v930 = vmul.f32 %v910, %v924
      %v931 = vmul.f32 %v911, %v924
      %v932 = vmul.f32 %v912, %v924
      %v933 = vmul.f32 %v913, %v924
      %v934 = vmul.f32 %v914, %v924
      %v935 = vmul.f32 %v915, %v924
      %v936 = vmul.f32 %v916, %v924
      %v937 = vmul.f32 %v917, %v924
      %v938 = vmul.f32 %v918, %v924
      %v939 = vmul.f32 %v919, %v924
      %v940 = vmul.f32 %v920, %v924
      %v941 = vadd.f32 %v889, %v925
      %v942 = vadd.f32 %v890, %v926
      %v943 = vadd.f32 %v891, %v927
      %v944 = vadd.f32 %v892, %v928
      %v945 = vadd.f32 %v893, %v929
      %v946 = vadd.f32 %v894, %v930
      %v947 = vadd.f32 %v895, %v931
      %v948 = vadd.f32 %v896, %v932
      %v949 = vadd.f32 %v897, %v933
      %v950 = vadd.f32 %v898, %v934
      %v951 = vadd.f32 %v899, %v935
      %v952 = vadd.f32 %v900, %v936
      %v953 = vadd.f32 %v901, %v937
      %v954 = vadd.f32 %v902, %v938
      %v955 = vadd.f32 %v903, %v939
      %v956 = vadd.f32 %v904, %v940
      %v957 = vld [vmem:[%s589] sm:$0xff]
      %v958 = vld [vmem:[%s589 + $0x8] sm:$0xff]
      %v959 = vld [vmem:[%s589 + $0x18] sm:$0xff]
      %v960 = vld [vmem:[%s589 + $0x20] sm:$0xff]
      %v961 = vld [vmem:[%s589 + $0x30] sm:$0xff]
      %v962 = vld [vmem:[%s589 + $0x38] sm:$0xff]
      %v963 = vld [vmem:[%s589 + $0x48] sm:$0xff]
      %v964 = vld [vmem:[%s589 + $0x50] sm:$0xff]
      %v965 = vld [vmem:[%s589 + $0x60] sm:$0xff]
      %v966 = vld [vmem:[%s589 + $0x68] sm:$0xff]
      %v967 = vld [vmem:[%s589 + $0x78] sm:$0xff]
      %v968 = vld [vmem:[%s589 + $0x80] sm:$0xff]
      %v969 = vld [vmem:[%s589 + $0x90] sm:$0xff]
      %v970 = vld [vmem:[%s589 + $0x98] sm:$0xff]
      %v971 = vld [vmem:[%s589 + $0xa8] sm:$0xff]
      %v972 = vld [vmem:[%s589 + $0xb0] sm:$0xff]
      %v973 = vlaneseq
      %v974 = vshrl.u32 %v973, 7
      %v975 = vsub.s32 3, %v974
      %v976 = vrot.slane %v799, %v975
      %v977 = vmul.f32 %v957, %v976
      %v978 = vmul.f32 %v958, %v976
      %v979 = vmul.f32 %v959, %v976
      %v980 = vmul.f32 %v960, %v976
      %v981 = vmul.f32 %v961, %v976
      %v982 = vmul.f32 %v962, %v976
      %v983 = vmul.f32 %v963, %v976
      %v984 = vmul.f32 %v964, %v976
      %v985 = vmul.f32 %v965, %v976
      %v986 = vmul.f32 %v966, %v976
      %v987 = vmul.f32 %v967, %v976
      %v988 = vmul.f32 %v968, %v976
      %v989 = vmul.f32 %v969, %v976
      %v990 = vmul.f32 %v970, %v976
      %v991 = vmul.f32 %v971, %v976
      %v992 = vmul.f32 %v972, %v976
      %v993 = vadd.f32 %v941, %v977
      %v994 = vadd.f32 %v942, %v978
      %v995 = vadd.f32 %v943, %v979
      %v996 = vadd.f32 %v944, %v980
      %v997 = vadd.f32 %v945, %v981
      %v998 = vadd.f32 %v946, %v982
      %v999 = vadd.f32 %v947, %v983
      %v1000 = vadd.f32 %v948, %v984
      %v1001 = vadd.f32 %v949, %v985
      %v1002 = vadd.f32 %v950, %v986
      %v1003 = vadd.f32 %v951, %v987
      %v1004 = vadd.f32 %v952, %v988
      %v1005 = vadd.f32 %v953, %v989
      %v1006 = vadd.f32 %v954, %v990
      %v1007 = vadd.f32 %v955, %v991
      %v1008 = vadd.f32 %v956, %v992
      %v1009 = vld [vmem:[%s589 + $0x1] sm:$0xff]
      %v1010 = vld [vmem:[%s589 + $0x9] sm:$0xff]
      %v1011 = vld [vmem:[%s589 + $0x19] sm:$0xff]
      %v1012 = vld [vmem:[%s589 + $0x21] sm:$0xff]
      %v1013 = vld [vmem:[%s589 + $0x31] sm:$0xff]
      %v1014 = vld [vmem:[%s589 + $0x39] sm:$0xff]
      %v1015 = vld [vmem:[%s589 + $0x49] sm:$0xff]
      %v1016 = vld [vmem:[%s589 + $0x51] sm:$0xff]
      %v1017 = vld [vmem:[%s589 + $0x61] sm:$0xff]
      %v1018 = vld [vmem:[%s589 + $0x69] sm:$0xff]
      %v1019 = vld [vmem:[%s589 + $0x79] sm:$0xff]
      %v1020 = vld [vmem:[%s589 + $0x81] sm:$0xff]
      %v1021 = vld [vmem:[%s589 + $0x91] sm:$0xff]
      %v1022 = vld [vmem:[%s589 + $0x99] sm:$0xff]
      %v1023 = vld [vmem:[%s589 + $0xa9] sm:$0xff]
      %v1024 = vld [vmem:[%s589 + $0xb1] sm:$0xff]
      %v1025 = vlaneseq
      %v1026 = vshrl.u32 %v1025, 7
      %v1027 = vsub.s32 4, %v1026
      %v1028 = vrot.slane %v799, %v1027
      %v1029 = vmul.f32 %v1009, %v1028
      %v1030 = vmul.f32 %v1010, %v1028
      %v1031 = vmul.f32 %v1011, %v1028
      %v1032 = vmul.f32 %v1012, %v1028
      %v1033 = vmul.f32 %v1013, %v1028
      %v1034 = vmul.f32 %v1014, %v1028
      %v1035 = vmul.f32 %v1015, %v1028
      %v1036 = vmul.f32 %v1016, %v1028
      %v1037 = vmul.f32 %v1017, %v1028
      %v1038 = vmul.f32 %v1018, %v1028
      %v1039 = vmul.f32 %v1019, %v1028
      %v1040 = vmul.f32 %v1020, %v1028
      %v1041 = vmul.f32 %v1021, %v1028
      %v1042 = vmul.f32 %v1022, %v1028
      %v1043 = vmul.f32 %v1023, %v1028
      %v1044 = vmul.f32 %v1024, %v1028
      %v1045 = vadd.f32 %v993, %v1029
      %v1046 = vadd.f32 %v994, %v1030
      %v1047 = vadd.f32 %v995, %v1031
      %v1048 = vadd.f32 %v996, %v1032
      %v1049 = vadd.f32 %v997, %v1033
      %v1050 = vadd.f32 %v998, %v1034
      %v1051 = vadd.f32 %v999, %v1035
      %v1052 = vadd.f32 %v1000, %v1036
      %v1053 = vadd.f32 %v1001, %v1037
      %v1054 = vadd.f32 %v1002, %v1038
      %v1055 = vadd.f32 %v1003, %v1039
      %v1056 = vadd.f32 %v1004, %v1040
      %v1057 = vadd.f32 %v1005, %v1041
      %v1058 = vadd.f32 %v1006, %v1042
      %v1059 = vadd.f32 %v1007, %v1043
      %v1060 = vadd.f32 %v1008, %v1044
      %v1061 = vld [vmem:[%s589 + $0x2] sm:$0xff]
      %v1062 = vld [vmem:[%s589 + $0xa] sm:$0xff]
      %v1063 = vld [vmem:[%s589 + $0x1a] sm:$0xff]
      %v1064 = vld [vmem:[%s589 + $0x22] sm:$0xff]
      %v1065 = vld [vmem:[%s589 + $0x32] sm:$0xff]
      %v1066 = vld [vmem:[%s589 + $0x3a] sm:$0xff]
      %v1067 = vld [vmem:[%s589 + $0x4a] sm:$0xff]
      %v1068 = vld [vmem:[%s589 + $0x52] sm:$0xff]
      %v1069 = vld [vmem:[%s589 + $0x62] sm:$0xff]
      %v1070 = vld [vmem:[%s589 + $0x6a] sm:$0xff]
      %v1071 = vld [vmem:[%s589 + $0x7a] sm:$0xff]
      %v1072 = vld [vmem:[%s589 + $0x82] sm:$0xff]
      %v1073 = vld [vmem:[%s589 + $0x92] sm:$0xff]
      %v1074 = vld [vmem:[%s589 + $0x9a] sm:$0xff]
      %v1075 = vld [vmem:[%s589 + $0xaa] sm:$0xff]
      %v1076 = vld [vmem:[%s589 + $0xb2] sm:$0xff]
      %v1077 = vlaneseq
      %v1078 = vshrl.u32 %v1077, 7
      %v1079 = vsub.s32 5, %v1078
      %v1080 = vrot.slane %v799, %v1079
      %v1081 = vmul.f32 %v1061, %v1080
      %v1082 = vmul.f32 %v1062, %v1080
      %v1083 = vmul.f32 %v1063, %v1080
      %v1084 = vmul.f32 %v1064, %v1080
      %v1085 = vmul.f32 %v1065, %v1080
      %v1086 = vmul.f32 %v1066, %v1080
      %v1087 = vmul.f32 %v1067, %v1080
      %v1088 = vmul.f32 %v1068, %v1080
      %v1089 = vmul.f32 %v1069, %v1080
      %v1090 = vmul.f32 %v1070, %v1080
      %v1091 = vmul.f32 %v1071, %v1080
      %v1092 = vmul.f32 %v1072, %v1080
      %v1093 = vmul.f32 %v1073, %v1080
      %v1094 = vmul.f32 %v1074, %v1080
      %v1095 = vmul.f32 %v1075, %v1080
      %v1096 = vmul.f32 %v1076, %v1080
      %v1097 = vadd.f32 %v1045, %v1081
      %v1098 = vadd.f32 %v1046, %v1082
      %v1099 = vadd.f32 %v1047, %v1083
      %v1100 = vadd.f32 %v1048, %v1084
      %v1101 = vadd.f32 %v1049, %v1085
      %v1102 = vadd.f32 %v1050, %v1086
      %v1103 = vadd.f32 %v1051, %v1087
      %v1104 = vadd.f32 %v1052, %v1088
      %v1105 = vadd.f32 %v1053, %v1089
      %v1106 = vadd.f32 %v1054, %v1090
      %v1107 = vadd.f32 %v1055, %v1091
      %v1108 = vadd.f32 %v1056, %v1092
      %v1109 = vadd.f32 %v1057, %v1093
      %v1110 = vadd.f32 %v1058, %v1094
      %v1111 = vadd.f32 %v1059, %v1095
      %v1112 = vadd.f32 %v1060, %v1096
      %s1113 = scalar_lea.vmem [#allocation2], 48
      %v1114 = vld [vmem:[%s1113] sm:$0xff]
      %v1115 = vld [vmem:[%s1113 + $0x8] sm:$0xff]
      %v1116 = vld [vmem:[%s1113 + $0x18] sm:$0xff]
      %v1117 = vld [vmem:[%s1113 + $0x20] sm:$0xff]
      %v1118 = vld [vmem:[%s1113 + $0x30] sm:$0xff]
      %v1119 = vld [vmem:[%s1113 + $0x38] sm:$0xff]
      %v1120 = vld [vmem:[%s1113 + $0x48] sm:$0xff]
      %v1121 = vld [vmem:[%s1113 + $0x50] sm:$0xff]
      %v1122 = vld [vmem:[%s1113 + $0x60] sm:$0xff]
      %v1123 = vld [vmem:[%s1113 + $0x68] sm:$0xff]
      %v1124 = vld [vmem:[%s1113 + $0x78] sm:$0xff]
      %v1125 = vld [vmem:[%s1113 + $0x80] sm:$0xff]
      %v1126 = vld [vmem:[%s1113 + $0x90] sm:$0xff]
      %v1127 = vld [vmem:[%s1113 + $0x98] sm:$0xff]
      %v1128 = vld [vmem:[%s1113 + $0xa8] sm:$0xff]
      %v1129 = vld [vmem:[%s1113 + $0xb0] sm:$0xff]
      %v1130 = vlaneseq
      %v1131 = vshrl.u32 %v1130, 7
      %v1132 = vsub.s32 6, %v1131
      %v1133 = vrot.slane %v799, %v1132
      %v1134 = vmul.f32 %v1114, %v1133
      %v1135 = vmul.f32 %v1115, %v1133
      %v1136 = vmul.f32 %v1116, %v1133
      %v1137 = vmul.f32 %v1117, %v1133
      %v1138 = vmul.f32 %v1118, %v1133
      %v1139 = vmul.f32 %v1119, %v1133
      %v1140 = vmul.f32 %v1120, %v1133
      %v1141 = vmul.f32 %v1121, %v1133
      %v1142 = vmul.f32 %v1122, %v1133
      %v1143 = vmul.f32 %v1123, %v1133
      %v1144 = vmul.f32 %v1124, %v1133
      %v1145 = vmul.f32 %v1125, %v1133
      %v1146 = vmul.f32 %v1126, %v1133
      %v1147 = vmul.f32 %v1127, %v1133
      %v1148 = vmul.f32 %v1128, %v1133
      %v1149 = vmul.f32 %v1129, %v1133
      %v1150 = vadd.f32 %v1097, %v1134
      %v1151 = vadd.f32 %v1098, %v1135
      %v1152 = vadd.f32 %v1099, %v1136
      %v1153 = vadd.f32 %v1100, %v1137
      %v1154 = vadd.f32 %v1101, %v1138
      %v1155 = vadd.f32 %v1102, %v1139
      %v1156 = vadd.f32 %v1103, %v1140
      %v1157 = vadd.f32 %v1104, %v1141
      %v1158 = vadd.f32 %v1105, %v1142
      %v1159 = vadd.f32 %v1106, %v1143
      %v1160 = vadd.f32 %v1107, %v1144
      %v1161 = vadd.f32 %v1108, %v1145
      %v1162 = vadd.f32 %v1109, %v1146
      %v1163 = vadd.f32 %v1110, %v1147
      %v1164 = vadd.f32 %v1111, %v1148
      %v1165 = vadd.f32 %v1112, %v1149
      %v1166 = vld [vmem:[%s1113 + $0x1] sm:$0xff]
      %v1167 = vld [vmem:[%s1113 + $0x9] sm:$0xff]
      %v1168 = vld [vmem:[%s1113 + $0x19] sm:$0xff]
      %v1169 = vld [vmem:[%s1113 + $0x21] sm:$0xff]
      %v1170 = vld [vmem:[%s1113 + $0x31] sm:$0xff]
      %v1171 = vld [vmem:[%s1113 + $0x39] sm:$0xff]
      %v1172 = vld [vmem:[%s1113 + $0x49] sm:$0xff]
      %v1173 = vld [vmem:[%s1113 + $0x51] sm:$0xff]
      %v1174 = vld [vmem:[%s1113 + $0x61] sm:$0xff]
      %v1175 = vld [vmem:[%s1113 + $0x69] sm:$0xff]
      %v1176 = vld [vmem:[%s1113 + $0x79] sm:$0xff]
      %v1177 = vld [vmem:[%s1113 + $0x81] sm:$0xff]
      %v1178 = vld [vmem:[%s1113 + $0x91] sm:$0xff]
      %v1179 = vld [vmem:[%s1113 + $0x99] sm:$0xff]
      %v1180 = vld [vmem:[%s1113 + $0xa9] sm:$0xff]
      %v1181 = vld [vmem:[%s1113 + $0xb1] sm:$0xff]
      %v1182 = vlaneseq
      %v1183 = vshrl.u32 %v1182, 7
      %v1184 = vsub.s32 7, %v1183
      %v1185 = vrot.slane %v799, %v1184
      %v1186 = vmul.f32 %v1166, %v1185
      %v1187 = vmul.f32 %v1167, %v1185
      %v1188 = vmul.f32 %v1168, %v1185
      %v1189 = vmul.f32 %v1169, %v1185
      %v1190 = vmul.f32 %v1170, %v1185
      %v1191 = vmul.f32 %v1171, %v1185
      %v1192 = vmul.f32 %v1172, %v1185
      %v1193 = vmul.f32 %v1173, %v1185
      %v1194 = vmul.f32 %v1174, %v1185
      %v1195 = vmul.f32 %v1175, %v1185
      %v1196 = vmul.f32 %v1176, %v1185
      %v1197 = vmul.f32 %v1177, %v1185
      %v1198 = vmul.f32 %v1178, %v1185
      %v1199 = vmul.f32 %v1179, %v1185
      %v1200 = vmul.f32 %v1180, %v1185
      %v1201 = vmul.f32 %v1181, %v1185
      %v1202 = vadd.f32 %v1150, %v1186
      %v1203 = vadd.f32 %v1151, %v1187
      %v1204 = vadd.f32 %v1152, %v1188
      %v1205 = vadd.f32 %v1153, %v1189
      %v1206 = vadd.f32 %v1154, %v1190
      %v1207 = vadd.f32 %v1155, %v1191
      %v1208 = vadd.f32 %v1156, %v1192
      %v1209 = vadd.f32 %v1157, %v1193
      %v1210 = vadd.f32 %v1158, %v1194
      %v1211 = vadd.f32 %v1159, %v1195
      %v1212 = vadd.f32 %v1160, %v1196
      %v1213 = vadd.f32 %v1161, %v1197
      %v1214 = vadd.f32 %v1162, %v1198
      %v1215 = vadd.f32 %v1163, %v1199
      %v1216 = vadd.f32 %v1164, %v1200
      %v1217 = vadd.f32 %v1165, %v1201
      %v1218 = vld [vmem:[%s1113 + $0x2] sm:$0xff]
      %v1219 = vld [vmem:[%s1113 + $0xa] sm:$0xff]
      %v1220 = vld [vmem:[%s1113 + $0x1a] sm:$0xff]
      %v1221 = vld [vmem:[%s1113 + $0x22] sm:$0xff]
      %v1222 = vld [vmem:[%s1113 + $0x32] sm:$0xff]
      %v1223 = vld [vmem:[%s1113 + $0x3a] sm:$0xff]
      %v1224 = vld [vmem:[%s1113 + $0x4a] sm:$0xff]
      %v1225 = vld [vmem:[%s1113 + $0x52] sm:$0xff]
      %v1226 = vld [vmem:[%s1113 + $0x62] sm:$0xff]
      %v1227 = vld [vmem:[%s1113 + $0x6a] sm:$0xff]
      %v1228 = vld [vmem:[%s1113 + $0x7a] sm:$0xff]
      %v1229 = vld [vmem:[%s1113 + $0x82] sm:$0xff]
      %v1230 = vld [vmem:[%s1113 + $0x92] sm:$0xff]
      %v1231 = vld [vmem:[%s1113 + $0x9a] sm:$0xff]
      %v1232 = vld [vmem:[%s1113 + $0xaa] sm:$0xff]
      %v1233 = vld [vmem:[%s1113 + $0xb2] sm:$0xff]
      %v1234 = vlaneseq
      %v1235 = vshrl.u32 %v1234, 7
      %v1236 = vsub.s32 0, %v1235
      %v1237 = vrot.slane %v800, %v1236
      %v1238 = vmul.f32 %v1218, %v1237
      %v1239 = vmul.f32 %v1219, %v1237
      %v1240 = vmul.f32 %v1220, %v1237
      %v1241 = vmul.f32 %v1221, %v1237
      %v1242 = vmul.f32 %v1222, %v1237
      %v1243 = vmul.f32 %v1223, %v1237
      %v1244 = vmul.f32 %v1224, %v1237
      %v1245 = vmul.f32 %v1225, %v1237
      %v1246 = vmul.f32 %v1226, %v1237
      %v1247 = vmul.f32 %v1227, %v1237
      %v1248 = vmul.f32 %v1228, %v1237
      %v1249 = vmul.f32 %v1229, %v1237
      %v1250 = vmul.f32 %v1230, %v1237
      %v1251 = vmul.f32 %v1231, %v1237
      %v1252 = vmul.f32 %v1232, %v1237
      %v1253 = vmul.f32 %v1233, %v1237
      %v1254 = vadd.f32 %v1202, %v1238
      %v1255 = vadd.f32 %v1203, %v1239
      %v1256 = vadd.f32 %v1204, %v1240
      %v1257 = vadd.f32 %v1205, %v1241
      %v1258 = vadd.f32 %v1206, %v1242
      %v1259 = vadd.f32 %v1207, %v1243
      %v1260 = vadd.f32 %v1208, %v1244
      %v1261 = vadd.f32 %v1209, %v1245
      %v1262 = vadd.f32 %v1210, %v1246
      %v1263 = vadd.f32 %v1211, %v1247
      %v1264 = vadd.f32 %v1212, %v1248
      %v1265 = vadd.f32 %v1213, %v1249
      %v1266 = vadd.f32 %v1214, %v1250
      %v1267 = vadd.f32 %v1215, %v1251
      %v1268 = vadd.f32 %v1216, %v1252
      %v1269 = vadd.f32 %v1217, %v1253
      %v1270 = vld [vmem:[%s4] sm:$0x1]
      %v1272 = vlaneseq
      %v1273 = vshrl.u32 %v1272, 7
      %v1274 = vsub.s32 0, %v1273
      %v1275 = vrot.slane %v1270, %v1274
      %v1277 = vadd.f32 %v1254, %v1275
      %v1278 = vadd.f32 %v1255, %v1275
      %v1279 = vadd.f32 %v1256, %v1275
      %v1280 = vadd.f32 %v1257, %v1275
      %v1281 = vadd.f32 %v1258, %v1275
      %v1282 = vadd.f32 %v1259, %v1275
      %v1283 = vadd.f32 %v1260, %v1275
      %v1284 = vadd.f32 %v1261, %v1275
      %v1285 = vadd.f32 %v1262, %v1275
      %v1286 = vadd.f32 %v1263, %v1275
      %v1287 = vadd.f32 %v1264, %v1275
      %v1288 = vadd.f32 %v1265, %v1275
      %v1289 = vadd.f32 %v1266, %v1275
      %v1290 = vadd.f32 %v1267, %v1275
      %v1291 = vadd.f32 %v1268, %v1275
      %v1292 = vadd.f32 %v1269, %v1275
      %v1293 = vmax.f32 %v1277, 0.0
      %v1294 = vmax.f32 %v1278, 0.0
      %v1295 = vmax.f32 %v1279, 0.0
      %v1296 = vmax.f32 %v1280, 0.0
      %v1297 = vmax.f32 %v1281, 0.0
      %v1298 = vmax.f32 %v1282, 0.0
      %v1299 = vmax.f32 %v1283, 0.0
      %v1300 = vmax.f32 %v1284, 0.0
      %v1301 = vmax.f32 %v1285, 0.0
      %v1302 = vmax.f32 %v1286, 0.0
      %v1303 = vmax.f32 %v1287, 0.0
      %v1304 = vmax.f32 %v1288, 0.0
      %v1305 = vmax.f32 %v1289, 0.0
      %v1306 = vmax.f32 %v1290, 0.0
      %v1307 = vmax.f32 %v1291, 0.0
      %v1308 = vmax.f32 %v1292, 0.0
      %v1309 = vmin.f32 %v1293, 6.0
      %v1310 = vmin.f32 %v1294, 6.0
      %v1311 = vmin.f32 %v1295, 6.0
      %v1312 = vmin.f32 %v1296, 6.0
      %v1313 = vmin.f32 %v1297, 6.0
      %v1314 = vmin.f32 %v1298, 6.0
      %v1315 = vmin.f32 %v1299, 6.0
      %v1316 = vmin.f32 %v1300, 6.0
      %v1317 = vmin.f32 %v1301, 6.0
      %v1318 = vmin.f32 %v1302, 6.0
      %v1319 = vmin.f32 %v1303, 6.0
      %v1320 = vmin.f32 %v1304, 6.0
      %v1321 = vmin.f32 %v1305, 6.0
      %v1322 = vmin.f32 %v1306, 6.0
      %v1323 = vmin.f32 %v1307, 6.0
      %v1324 = vmin.f32 %v1308, 6.0
      %v1325 = vld [vmem:[%s5] sm:$0xff]
      %v1326 = vld [vmem:[%s5 + $0x8] sm:$0xff]
      %v1327 = vld [vmem:[%s5 + $0x10] sm:$0xff]
      %v1328 = vld [vmem:[%s5 + $0x18] sm:$0xff]
      %v1329 = vld [vmem:[%s6] sm:$0x1]
      %v1331 = vlaneseq
      %v1332 = vshrl.u32 %v1331, 7
      %v1333 = vsub.s32 0, %v1332
      %v1334 = vrot.slane %v1329, %v1333
      %v1337 = vsel %vm307, %v1309, 0
      %v1340 = vsel %vm307, %v1310, 0
      %v1343 = vsel %vm307, %v1311, 0
      %v1346 = vsel %vm307, %v1312, 0
      %v1349 = vsel %vm307, %v1313, 0
      %v1352 = vsel %vm307, %v1314, 0
      %v1355 = vsel %vm307, %v1315, 0
      %v1358 = vsel %vm307, %v1316, 0
      %v1361 = vsel %vm307, %v1317, 0
      %v1364 = vsel %vm307, %v1318, 0
      %v1367 = vsel %vm307, %v1319, 0
      %v1370 = vsel %vm307, %v1320, 0
      %v1373 = vsel %vm307, %v1321, 0
      %v1376 = vsel %vm307, %v1322, 0
      %v1379 = vsel %vm307, %v1323, 0
      %v1382 = vsel %vm307, %v1324, 0
      %1384 = vmatprep.subr.mxu0 0.0
      %1385 = vmatpush1.msra.mxu0 0.0
      %1386 = vmatprep.subr.mxu0 0.0
      %1387 = vmatpush1.msra.mxu0 0.0
      %1388 = vmatprep.subr.mxu0 0.0
      %1389 = vmatpush1.msra.mxu0 0.0
      %1390 = vmatprep.subr.mxu0 0.0
      %1391 = vmatpush1.msra.mxu0 0.0
      %1392 = vmatprep.subr.mxu0 0.0
      %1393 = vmatpush1.msra.mxu0 0.0
      %1394 = vmatprep.subr.mxu0 0.0
      %1395 = vmatpush1.msra.mxu0 0.0
      %1396 = vmatprep.subr.mxu0 0.0
      %1397 = vmatpush1.msra.mxu0 0.0
      %1398 = vmatprep.subr.mxu0 0.0
      %1399 = vmatpush1.msra.mxu0 0.0
      %1400 = vmatprep.subr.mxu0 0.0
      %1401 = vmatpush1.msra.mxu0 0.0
      %1402 = vmatprep.subr.mxu0 0.0
      %1403 = vmatpush1.msra.mxu0 0.0
      %1404 = vmatprep.subr.mxu0 0.0
      %1405 = vmatpush1.msra.mxu0 0.0
      %1406 = vmatprep.subr.mxu0 0.0
      %1407 = vmatpush1.msra.mxu0 0.0
      %1408 = vmatprep.subr.mxu0 0.0
      %1409 = vmatpush1.msra.mxu0 %v1328
      %1410 = vmatprep.subr.mxu0 0.0
      %1411 = vmatpush1.msra.mxu0 %v1327
      %1412 = vmatprep.subr.mxu0 0.0
      %1413 = vmatpush1.msra.mxu0 %v1326
      %1414 = vmatprep.subr.mxu0 0.0
      %1415 = vmatpush1.msra.mxu0 %v1325
      %1416 = vmatprep.subr.mxu0 0.0
      %1417 = vmatpush2.msra.mxu0 0.0
      %1418 = vmatprep.subr.mxu0 0.0
      %1419 = vmatpush2.msra.mxu0 0.0
      %1420 = vmatprep.subr.mxu0 0.0
      %1421 = vmatpush2.msra.mxu0 0.0
      %1422 = vmatprep.subr.mxu0 0.0
      %1423 = vmatpush2.msra.mxu0 0.0
      %1424 = vmatprep.subr.mxu0 0.0
      %1425 = vmatpush2.msra.mxu0 0.0
      %1426 = vmatprep.subr.mxu0 0.0
      %1427 = vmatpush2.msra.mxu0 0.0
      %1428 = vmatprep.subr.mxu0 0.0
      %1429 = vmatpush2.msra.mxu0 0.0
      %1430 = vmatprep.subr.mxu0 0.0
      %1431 = vmatpush2.msra.mxu0 0.0
      %1432 = vmatprep.subr.mxu0 0.0
      %1433 = vmatpush2.msra.mxu0 0.0
      %1434 = vmatprep.subr.mxu0 0.0
      %1435 = vmatpush2.msra.mxu0 0.0
      %1436 = vmatprep.subr.mxu0 0.0
      %1437 = vmatpush2.msra.mxu0 0.0
      %1438 = vmatprep.subr.mxu0 0.0
      %1439 = vmatpush2.msra.mxu0 0.0
      %1440 = vmatprep.subr.mxu0 0.0
      %1441 = vmatpush2.msra.mxu0 0.0
      %1442 = vmatprep.subr.mxu0 0.0
      %1443 = vmatpush2.msra.mxu0 0.0
      %1444 = vmatprep.subr.mxu0 0.0
      %1445 = vmatpush2.msra.mxu0 0.0
      %1446 = vmatprep.subr.mxu0 0.0
      %1447 = vmatpush2.msra.mxu0 0.0
      %1448 = vmatprep.mubr.f32.mxu0 0.0
      %1449 = vmatmul.mubr.f32.gmra.mxu0 %v1337
      %v1450 = vpop.f32.mrf.mxu0
      %v1451 = vadd.f32 %v1334, %v1450
      %v1452 = vpop.f32.mrf.mxu0
      %1453 = vmatprep.mubr.f32.mxu0 0.0
      %1454 = vmatmul.mubr.f32.gmra.mxu0 %v1340
      %v1455 = vpop.f32.mrf.mxu0
      %v1456 = vadd.f32 %v1334, %v1455
      %v1457 = vpop.f32.mrf.mxu0
      %1458 = vmatprep.mubr.f32.mxu0 0.0
      %1459 = vmatmul.mubr.f32.gmra.mxu0 %v1343
      %v1460 = vpop.f32.mrf.mxu0
      %v1461 = vadd.f32 %v1334, %v1460
      %v1462 = vpop.f32.mrf.mxu0
      %1463 = vmatprep.mubr.f32.mxu0 0.0
      %1464 = vmatmul.mubr.f32.gmra.mxu0 %v1346
      %v1465 = vpop.f32.mrf.mxu0
      %v1466 = vadd.f32 %v1334, %v1465
      %v1467 = vpop.f32.mrf.mxu0
      %1468 = vmatprep.mubr.f32.mxu0 0.0
      %1469 = vmatmul.mubr.f32.gmra.mxu0 %v1349
      %v1470 = vpop.f32.mrf.mxu0
      %v1471 = vadd.f32 %v1334, %v1470
      %v1472 = vpop.f32.mrf.mxu0
      %1473 = vmatprep.mubr.f32.mxu0 0.0
      %1474 = vmatmul.mubr.f32.gmra.mxu0 %v1352
      %v1475 = vpop.f32.mrf.mxu0
      %v1476 = vadd.f32 %v1334, %v1475
      %v1477 = vpop.f32.mrf.mxu0
      %1478 = vmatprep.mubr.f32.mxu0 0.0
      %1479 = vmatmul.mubr.f32.gmra.mxu0 %v1355
      %v1480 = vpop.f32.mrf.mxu0
      %v1481 = vadd.f32 %v1334, %v1480
      %v1482 = vpop.f32.mrf.mxu0
      %1483 = vmatprep.mubr.f32.mxu0 0.0
      %1484 = vmatmul.mubr.f32.gmra.mxu0 %v1358
      %v1485 = vpop.f32.mrf.mxu0
      %v1486 = vadd.f32 %v1334, %v1485
      %v1487 = vpop.f32.mrf.mxu0
      %1488 = vmatprep.mubr.f32.mxu0 0.0
      %1489 = vmatmul.mubr.f32.gmra.mxu0 %v1361
      %v1490 = vpop.f32.mrf.mxu0
      %v1491 = vadd.f32 %v1334, %v1490
      %v1492 = vpop.f32.mrf.mxu0
      %1493 = vmatprep.mubr.f32.mxu0 0.0
      %1494 = vmatmul.mubr.f32.gmra.mxu0 %v1364
      %v1495 = vpop.f32.mrf.mxu0
      %v1496 = vadd.f32 %v1334, %v1495
      %v1497 = vpop.f32.mrf.mxu0
      %1498 = vmatprep.mubr.f32.mxu0 0.0
      %1499 = vmatmul.mubr.f32.gmra.mxu0 %v1367
      %v1500 = vpop.f32.mrf.mxu0
      %v1501 = vadd.f32 %v1334, %v1500
      %v1502 = vpop.f32.mrf.mxu0
      %1503 = vmatprep.mubr.f32.mxu0 0.0
      %1504 = vmatmul.mubr.f32.gmra.mxu0 %v1370
      %v1505 = vpop.f32.mrf.mxu0
      %v1506 = vadd.f32 %v1334, %v1505
      %v1507 = vpop.f32.mrf.mxu0
      %1508 = vmatprep.mubr.f32.mxu0 0.0
      %1509 = vmatmul.mubr.f32.gmra.mxu0 %v1373
      %v1510 = vpop.f32.mrf.mxu0
      %v1511 = vadd.f32 %v1334, %v1510
      %v1512 = vpop.f32.mrf.mxu0
      %1513 = vmatprep.mubr.f32.mxu0 0.0
      %1514 = vmatmul.mubr.f32.gmra.mxu0 %v1376
      %v1515 = vpop.f32.mrf.mxu0
      %v1516 = vadd.f32 %v1334, %v1515
      %v1517 = vpop.f32.mrf.mxu0
      %1518 = vmatprep.mubr.f32.mxu0 0.0
      %1519 = vmatmul.mubr.f32.gmra.mxu0 %v1379
      %v1520 = vpop.f32.mrf.mxu0
      %v1521 = vadd.f32 %v1334, %v1520
      %v1522 = vpop.f32.mrf.mxu0
      %1523 = vmatprep.mubr.f32.mxu0 0.0
      %1524 = vmatmul.mubr.f32.gmra.mxu0 %v1382
      %v1525 = vpop.f32.mrf.mxu0
      %v1526 = vadd.f32 %v1334, %v1525
      %v1527 = vpop.f32.mrf.mxu0
      %1528 = vdwg.mxu0
      %v1529 = vld [vmem:[%s340] sm:$0xff]
      %v1530 = vld [vmem:[%s340 + $0x8] sm:$0xff]
      %v1531 = vld [vmem:[%s340 + $0x10] sm:$0xff]
      %v1532 = vld [vmem:[%s340 + $0x18] sm:$0xff]
      %v1533 = vld [vmem:[%s340 + $0x20] sm:$0xff]
      %v1534 = vld [vmem:[%s340 + $0x28] sm:$0xff]
      %v1535 = vld [vmem:[%s340 + $0x30] sm:$0xff]
      %v1536 = vld [vmem:[%s340 + $0x38] sm:$0xff]
      %v1537 = vld [vmem:[%s340 + $0x40] sm:$0xff]
      %v1538 = vld [vmem:[%s340 + $0x48] sm:$0xff]
      %v1539 = vld [vmem:[%s340 + $0x50] sm:$0xff]
      %v1540 = vld [vmem:[%s340 + $0x58] sm:$0xff]
      %v1541 = vld [vmem:[%s340 + $0x60] sm:$0xff]
      %v1542 = vld [vmem:[%s340 + $0x68] sm:$0xff]
      %v1543 = vld [vmem:[%s340 + $0x70] sm:$0xff]
      %v1544 = vld [vmem:[%s340 + $0x78] sm:$0xff]
      %v1545 = vadd.f32 %v1451, %v1529
      %v1546 = vadd.f32 %v1456, %v1530
      %v1547 = vadd.f32 %v1461, %v1531
      %v1548 = vadd.f32 %v1466, %v1532
      %v1549 = vadd.f32 %v1471, %v1533
      %v1550 = vadd.f32 %v1476, %v1534
      %v1551 = vadd.f32 %v1481, %v1535
      %v1552 = vadd.f32 %v1486, %v1536
      %v1553 = vadd.f32 %v1491, %v1537
      %v1554 = vadd.f32 %v1496, %v1538
      %v1555 = vadd.f32 %v1501, %v1539
      %v1556 = vadd.f32 %v1506, %v1540
      %v1557 = vadd.f32 %v1511, %v1541
      %v1558 = vadd.f32 %v1516, %v1542
      %v1559 = vadd.f32 %v1521, %v1543
      %v1560 = vadd.f32 %v1526, %v1544
      %1561 = vst.msk [vmem:[%s302] sm:$0xff] %vm363, %v1545
      %1562 = vst.msk [vmem:[%s302 + $0x8] sm:$0xff] %vm363, %v1546
      %1563 = vst.msk [vmem:[%s302 + $0x10] sm:$0xff] %vm363, %v1547
      %1564 = vst.msk [vmem:[%s302 + $0x18] sm:$0xff] %vm363, %v1548
      %1565 = vst.msk [vmem:[%s302 + $0x20] sm:$0xff] %vm363, %v1549
      %1566 = vst.msk [vmem:[%s302 + $0x28] sm:$0xff] %vm363, %v1550
      %1567 = vst.msk [vmem:[%s302 + $0x30] sm:$0xff] %vm363, %v1551
      %1568 = vst.msk [vmem:[%s302 + $0x38] sm:$0xff] %vm363, %v1552
      %1569 = vst.msk [vmem:[%s302 + $0x40] sm:$0xff] %vm363, %v1553
      %1570 = vst.msk [vmem:[%s302 + $0x48] sm:$0xff] %vm363, %v1554
      %1571 = vst.msk [vmem:[%s302 + $0x50] sm:$0xff] %vm363, %v1555
      %1572 = vst.msk [vmem:[%s302 + $0x58] sm:$0xff] %vm363, %v1556
      %1573 = vst.msk [vmem:[%s302 + $0x60] sm:$0xff] %vm363, %v1557
      %1574 = vst.msk [vmem:[%s302 + $0x68] sm:$0xff] %vm363, %v1558
      %1575 = vst.msk [vmem:[%s302 + $0x70] sm:$0xff] %vm363, %v1559
      %1576 = vst.msk [vmem:[%s302 + $0x78] sm:$0xff] %vm363, %v1560
      %s1577 = smul.u32 8, %s23
      %p1578 = scmp.lt.s32.totalorder %s22, 1
      %s1579 = scalar_select %p1578, %s22, 1
      %p1580 = scmp.lt.s32.totalorder %s1577, 15
      %s1581 = scalar_select %p1580, %s1577, 15
      %s1582 = smul.addr %s1581, 2
      %s1583 = smul.addr %s1579, 32
      %s1584 = sadd.s32 %s1582, %s1583
      %s1585 = smul.addr %s1584, 8
      %s1586 = scalar_lea.vmem %s7, %s1585
      // Predicated region
      $region57: #{tpu_custom_call.1} parent=47 // pred_check
        %p1587 = pneg %p202
      $region58: #{tpu_custom_call.1} parent=47 // pred_check_branch
        %1589 = sbr.rel (%p1587) target = $region60
      $region59: #{tpu_custom_call.1} parent=47 // pred_region
        %s1590 = smul.u32 8, %s23
      $region60: #{tpu_custom_call.1} parent=47 // pred_fallthru
        _
    $region48: #{tpu_custom_call.1} parent=5 // pred_fallthru
      _
    %p1591 = scmp.le.s32.totalorder 2, %s13
    // Predicated region
    $region61: #{tpu_custom_call.1} parent=5 // pred_check
      %p1592 = pneg %p1591
    $region62: #{tpu_custom_call.1} parent=5 // pred_check_branch
      %1594 = sbr.rel (%p1592) target = $region64
    $region63: #{tpu_custom_call.1} parent=5 // pred_region
      %s1595 = ssub.s32 %s13, 2
      // Predicated region
      $region65: #{tpu_custom_call.1} parent=63 // pred_check
        %p1596 = pneg %p208
      $region66: #{tpu_custom_call.1} parent=63 // pred_check_branch
        %1598 = sbr.rel (%p1596) target = $region68
      $region67: #{tpu_custom_call.1} parent=63 // pred_region
        %s1599 = smul.u32 8, %s25
        %p1600 = scmp.lt.s32.totalorder %s24, 1
        %s1601 = scalar_select %p1600, %s24, 1
        %p1602 = scmp.lt.s32.totalorder %s1599, 15
        %s1603 = scalar_select %p1602, %s1599, 15
        %s1604 = smul.addr %s1603, 2
        %s1605 = smul.addr %s1601, 32
        %s1606 = sadd.s32 %s1604, %s1605
        %s1607 = smul.addr %s1606, 8
        %s1608 = scalar_lea.vmem %s7, %s1607
      $region68: #{tpu_custom_call.1} parent=63 // pred_fallthru
        _
    $region64: #{tpu_custom_call.1} parent=5 // pred_fallthru
      _
  $region6: #{tpu_custom_call.1} parent=0 // loop_footer
    %s17 = sadd.s32 1, %s13
  $region7: #{tpu_custom_call.1} parent=0 // loop_footer_branch
    %12 = sbr.rel target = $region3
  $region8: #{tpu_custom_call.1} parent=0 // loop_exit
    _

</llo_original>
